<compile_context>
chip_gen: v6e
topology: v6e:2x2x1
jax: 0.10.0
libtpu: 0.0.40
codegen_flags: <defaults>
</compile_context>

<pallas_src>
import math
import functools

import jax
import jax.numpy as jnp
import numpy as np
from jax import lax
from jax.experimental import pallas as pl
from jax.experimental.pallas import tpu as pltpu

BN_EPS = 1e-5
NEG_INF = -1.0e9


# ----------------------------- Pallas kernel -------------------------------

def din_kernel(cand_ref, hist_ref, len_ref, *refs,
               n_mlp, pool_on_mxu, compute_dtype, approx_recip):
    """One batch tile of the full DIN forward pass (eval mode).

    cand_ref : (TB, F)        candidate features (compute_dtype)
    hist_ref : (TB*S, F)      history features, pre-flattened on the host
    len_ref  : (TB, 1) int32  history lengths (precondition: >= 1)
    refs     : folded params..., out_ref (TB, 1) f32
    """
    out_ref = refs[-1]
    prefs = refs[:-1]

    w_emb = prefs[0][...]        # (F, E)  compute_dtype
    b_emb = prefs[1][...]        # (1, E)  f32
    w_qf = prefs[2][...]         # (F, A)  = w_emb @ w_q     compute_dtype
    b_q = prefs[3][...]          # (1, A)  = b_emb @ w_q     f32
    w_kf = prefs[4][...]         # (F, A)  = w_emb @ w_k     compute_dtype
    b_k = prefs[5][...]          # (1, A)  = b_emb @ w_k     f32
    w_v = prefs[6][...]          # (A, 1)  f32 (attention-score weights stay f32)
    w0_int = prefs[7][...]       # (E, H1) first MLP layer split by input block
    w0_cand = prefs[8][...]      # (E, H1)
    w0_avg = prefs[9][...]       # (E, H1)
    b0 = prefs[10][...]          # (1, H1) f32 (BN folded)
    rest = prefs[11:-2]          # (W, b) per remaining MLP layer (BN folded)
    w_out = prefs[-2][...]       # (H_last, 1)
    b_out = prefs[-1][...]       # (1, 1)  f32

    cand = cand_ref[...]         # (TB, F)   compute_dtype
    histf = hist_ref[...]        # (TB*S, F) compute_dtype
    lens = len_ref[...]          # (TB, 1)   int32

    TB = cand.shape[0]
    S = histf.shape[0] // TB
    E = w_emb.shape[1]
    A = w_v.shape[0]

    # --- item embedding + attention q/k projections --------------------------
    # Separate, lane-aligned matmuls (no intra-128-lane slicing of a fused
    # [E|A] result).  All matmul results accumulate in f32.
    cand_emb = jnp.dot(cand, w_emb, preferred_element_type=jnp.float32) + b_emb     # (TB, E)
    q_h = jnp.dot(cand, w_qf, preferred_element_type=jnp.float32) + b_q             # (TB, A)
    hist_emb2 = jnp.dot(histf, w_emb, preferred_element_type=jnp.float32) + b_emb   # (TB*S, E)
    k_h2 = jnp.dot(histf, w_kf, preferred_element_type=jnp.float32) + b_k           # (TB*S, A)

    hist_emb = hist_emb2.reshape(TB, S, E)          # free when S % 8 == 0 (f32)
    k_h = k_h2.reshape(TB, S, A)

    # --- attention hidden layer (VPU add + ReLU, f32) -------------------------
    hidden = jnp.maximum(q_h[:, None, :] + k_h, 0.0)                                # (TB, S, A)

    def _recip(x):
        return pl.reciprocal(x, approx=True) if approx_recip else 1.0 / x

    if pool_on_mxu:
        # Large-S path: softmax in (TB, S) lane layout; attention + masked-mean
        # pooling fused into ONE batched MXU matmul (TB,2,S)@(TB,S,E).
        # Coefficients stay f32 (bf16 attn degrades the sum-to-one property).
        w_v_row = w_v[:, 0]
        scores = jnp.sum(hidden * w_v_row[None, None, :], axis=-1)                  # (TB, S)
        iota = lax.broadcasted_iota(jnp.int32, (TB, S), 1)
        mask = iota < lens                                                           # (TB, S)
        scores = jnp.where(mask, scores, NEG_INF)
        scores = scores - jnp.max(scores, axis=1, keepdims=True)
        ex = jnp.exp(scores)
        attn = ex * _recip(jnp.sum(ex, axis=1, keepdims=True))                       # (TB, S)

        lens_f = jnp.maximum(lens.astype(jnp.float32), 1.0)                          # (TB, 1)
        mean_w = mask.astype(jnp.float32) * _recip(lens_f)                           # (TB, S)
        coeff = jnp.concatenate([attn[:, None, :], mean_w[:, None, :]], axis=1)      # (TB, 2, S)
        pooled = jnp.einsum('bks,bse->bke', coeff, hist_emb,
                            preferred_element_type=jnp.float32)                      # (TB, 2, E)
        interest = pooled[:, 0, :]                                                   # (TB, E)
        avg_hist = pooled[:, 1, :]                                                   # (TB, E)
    else:
        # Small-S path: score reduction on the (idle) MXU; the softmax is kept
        # in a (TB, S, 1) sublane layout so the attention weights broadcast
        # against hist_emb (TB, S, E) with a free lane-broadcast (no
        # lane<->sublane relayout), and pooling is two cheap VPU/XLU
        # weighted reductions entirely in f32.
        scores = jnp.dot(hidden.reshape(TB * S, A), w_v,
                         preferred_element_type=jnp.float32).reshape(TB, S, 1)       # (TB, S, 1)
        iota = lax.broadcasted_iota(jnp.int32, (S, 1), 0)                            # (S, 1)
        lens3 = lens.reshape(TB, 1, 1)
        mask = iota[None, :, :] < lens3                                              # (TB, S, 1)
        scores = jnp.where(mask, scores, NEG_INF)
        scores = scores - jnp.max(scores, axis=1, keepdims=True)
        ex = jnp.exp(scores)
        attn = ex * _recip(jnp.sum(ex, axis=1, keepdims=True))                       # (TB, S, 1)

        lens_f = jnp.maximum(lens3.astype(jnp.float32), 1.0)
        mean_w = mask.astype(jnp.float32) * _recip(lens_f)                           # (TB, S, 1)
        interest = jnp.sum(attn * hist_emb, axis=1)                                  # (TB, E)
        avg_hist = jnp.sum(mean_w * hist_emb, axis=1)                                # (TB, E)

    # --- MLP: first layer with the concat eliminated (W0 split on the host) ---
    x = (jnp.dot(interest.astype(compute_dtype), w0_int,
                 preferred_element_type=jnp.float32)
         + jnp.dot(cand_emb.astype(compute_dtype), w0_cand,
                   preferred_element_type=jnp.float32)
         + jnp.dot(avg_hist.astype(compute_dtype), w0_avg,
                   preferred_element_type=jnp.float32)
         + b0)
    x = jnp.maximum(x, 0.0)

    # Remaining Linear (BN folded) -> ReLU layers; Dropout = identity in eval.
    for li in range(n_mlp - 1):
        w = rest[2 * li][...]
        b = rest[2 * li + 1][...]
        x = jnp.dot(x.astype(compute_dtype), w, preferred_element_type=jnp.float32) + b
        x = jnp.maximum(x, 0.0)

    logits = jnp.dot(x.astype(compute_dtype), w_out,
                     preferred_element_type=jnp.float32) + b_out                     # (TB, 1)
    out_ref[...] = jax.nn.sigmoid(logits)
    # Output traffic is B floats total, so a lane-dense (num_tiles, tb) output
    # slab is intentionally not used (masked vst cost is negligible here).


# ------------------------- Host-side param folding --------------------------

def fold_din_params(params, compute_dtype):
    """Fold eval-mode BatchNorm into the preceding Linear, pre-multiply the
    attention q/k projections into item-feature space, split the first MLP
    weight into its three (E, H1) input blocks and cast matmul weights to
    compute_dtype (biases and w_v stay f32)."""
    hp = lax.Precision.HIGHEST
    w_emb, b_emb, w_q, w_k, w_v = params[:5]
    mlp_params = params[5:-2]
    w_out, b_out = params[-2:]
    E = w_emb.shape[1]

    w_qf = jnp.dot(w_emb, w_q, precision=hp)       # (F, A)
    b_q = jnp.dot(b_emb, w_q, precision=hp)        # (1, A)
    w_kf = jnp.dot(w_emb, w_k, precision=hp)       # (F, A)
    b_k = jnp.dot(b_emb, w_k, precision=hp)        # (1, A)

    n_mlp = len(mlp_params) // 6
    mlp_ws, mlp_bs = [], []
    for li in range(n_mlp):
        w, b, g, bt, rm, rv = mlp_params[6 * li: 6 * li + 6]
        scale = g * lax.rsqrt(rv + BN_EPS)           # (1, h)
        mlp_ws.append(w * scale)                     # W' = W @ diag(scale)
        mlp_bs.append((b - rm) * scale + bt)         # b'
    w0 = mlp_ws[0]                                   # (3E, H1)

    cd = compute_dtype
    f32 = jnp.float32
    folded = [w_emb.astype(cd), b_emb.astype(f32),
              w_qf.astype(cd), b_q.astype(f32),
              w_kf.astype(cd), b_k.astype(f32),
              w_v.astype(f32),
              w0[:E].astype(cd), w0[E:2 * E].astype(cd), w0[2 * E:].astype(cd),
              mlp_bs[0].astype(f32)]
    for li in range(1, n_mlp):
        folded += [mlp_ws[li].astype(cd), mlp_bs[li].astype(f32)]
    folded += [w_out.astype(cd), b_out.astype(f32)]
    return folded, n_mlp


# ------------------------------ Wrapper ------------------------------------

def _const_map(ndim):
    return lambda i: (0,) * ndim


def _round_up(x, m):
    return -(-int(x) // m) * m


def _sublane_tile(itemsize):
    return {4: 8, 2: 16, 1: 32}.get(int(itemsize), 8)


def _tile_bytes(rows, cols, itemsize):
    """VMEM footprint of a (rows, cols) array: last dim rounded up to 128 lanes,
    second-to-last rounded up to the dtype sublane tile."""
    return (_round_up(max(int(rows), 1), _sublane_tile(itemsize))
            * _round_up(max(int(cols), 1), 128) * int(itemsize))


def _estimate_vmem_bytes(tb, S, F, E, A, mlp_dims, hist_itemsize, folded):
    f4 = 4
    # Double-buffered streamed tiles (inputs + output).
    io = 2 * (_tile_bytes(tb * S, F, hist_itemsize)
              + _tile_bytes(tb, F, hist_itemsize)
              + 2 * _tile_bytes(tb, 1, f4))
    # Constant-index params still get 2 pipeline buffers each.
    par = 2 * sum(_tile_bytes(p.shape[0], p.shape[1], p.dtype.itemsize)
                  for p in folded)
    # f32 intermediates live inside one grid step (generous upper bound).
    big = max(E, A)
    mx = max([E] + list(mlp_dims))
    inter = (3 * _tile_bytes(tb * S, E, f4)          # hist_emb + pooling products
             + 3 * _tile_bytes(tb * S, A, f4)        # k_h, hidden, temp
             + 6 * _tile_bytes(tb * S, 1, f4)        # scores / mask / attn / mean_w
             + 6 * _tile_bytes(tb, big, f4)          # cand_emb, q_h, interest, avg, temps
             + 4 * _tile_bytes(tb, mx, f4))          # MLP activations
    return io + par + inter


def _vmem_capacity_bytes():
    try:
        return int(pltpu.get_tpu_info().vmem_capacity_bytes)
    except Exception:
        return 64 * 1024 * 1024      # conservative default (v7x per-TensorCore)


def _choose_tb(B, fits, max_tb, min_grid=4):
    divs = [d for d in range(1, B + 1) if B % d == 0]
    # (8,128) rule: the batch tile must be a sublane multiple or the full batch.
    cands = [d for d in divs if d <= max_tb and (d % 8 == 0 or d == B)]
    if not cands:
        cands = [d for d in divs if d <= max_tb] or [B]
    # Prefer >= min_grid steps (2 v7x TensorCores x double-buffering), then 2, then 1.
    for want in (min_grid, 2, 1):
        ok = [d for d in cands if B // d >= want and fits(d)]
        if ok:
            return max(ok)
    return min(cands)


def din_forward_pallas(cand, hist, lens, params, *, tb=None, max_tb=512,
                       compute_dtype=jnp.float32, vmem_budget_bytes=None):
    """DIN forward pass. `params` is the raw (unfused) parameter list; BN folding,
    weight fusion, history flattening and dtype casting happen on the host."""
    B, S, F = hist.shape
    folded, n_mlp = fold_din_params(params, compute_dtype)

    E = folded[0].shape[1]
    A = folded[6].shape[0]
    mlp_dims = [folded[7].shape[1]] + [folded[11 + 2 * i].shape[1]
                                       for i in range(n_mlp - 1)]
    hist_itemsize = jnp.dtype(compute_dtype).itemsize

    cap = _vmem_capacity_bytes()
    # ~80% of physical VMEM, never above 100 MiB: ~51 MiB on v7x (64 MiB parts),
    # ~100 MiB on v5e/v6e (128 MiB parts).
    ceiling = min(int(cap * 0.8), 100 * 1024 * 1024)
    if vmem_budget_bytes is None:
        vmem_budget_bytes = int(ceiling * 0.75)

    if tb is None:
        fits = lambda d: _estimate_vmem_bytes(
            d, S, F, E, A, mlp_dims, hist_itemsize, folded) <= vmem_budget_bytes
        tb = _choose_tb(B, fits, max_tb=max_tb)
    assert B % tb == 0, f"batch {B} must be divisible by tile {tb}"

    est = _estimate_vmem_bytes(tb, S, F, E, A, mlp_dims, hist_itemsize, folded)
    vmem_limit = int(min(ceiling, max(32 * 1024 * 1024, int(1.5 * est))))

    # Flatten history ONCE on the host so the kernel's big matmul input is 2D.
    hist_flat = hist.reshape(B * S, F).astype(compute_dtype)
    cand_in = cand.astype(compute_dtype)
    lens2d = lens.reshape(B, 1).astype(jnp.int32)

    data_specs = [
        pl.BlockSpec((tb, F), lambda i: (i, 0)),
        pl.BlockSpec((tb * S, F), lambda i: (i, 0)),
        pl.BlockSpec((tb, 1), lambda i: (i, 0)),
    ]
    param_specs = [pl.BlockSpec(p.shape, _const_map(p.ndim)) for p in folded]

    kernel = functools.partial(
        din_kernel, n_mlp=n_mlp, pool_on_mxu=(S >= 128),
        compute_dtype=compute_dtype,
        approx_recip=(jnp.dtype(compute_dtype) != jnp.dtype(jnp.float32)))

    out = pl.pallas_call(
        kernel,
        out_shape=jax.ShapeDtypeStruct((B, 1), jnp.float32),
        grid=(B // tb,),
        in_specs=data_specs + param_specs,
        out_specs=pl.BlockSpec((tb, 1), lambda i: (i, 0)),
        compiler_params=pltpu.CompilerParams(
            dimension_semantics=("parallel",),
            vmem_limit_bytes=vmem_limit),
    )(cand_in, hist_flat, lens2d, *folded)
    return out.reshape(B)


# ------------------------- Parameter construction --------------------------

def _linear(key, in_dim, out_dim, bias=True):
    bound = 1.0 / math.sqrt(in_dim)
    kw, kb = jax.random.split(key)
    w = jax.random.uniform(kw, (in_dim, out_dim), jnp.float32, -bound, bound)
    if not bias:
        return (w,)
    b = jax.random.uniform(kb, (1, out_dim), jnp.float32, -bound, bound)
    return (w, b)


def make_din_params(key, item_feat_dim, embedding_dim, attention_dim, mlp_hidden_dims):
    keys = jax.random.split(key, 8 + len(mlp_hidden_dims))
    params = []
    params += list(_linear(keys[0], item_feat_dim, embedding_dim))                 # item_embedding W, b
    params += list(_linear(keys[1], embedding_dim, attention_dim, bias=False))     # w_query
    params += list(_linear(keys[2], embedding_dim, attention_dim, bias=False))     # w_key
    params += list(_linear(keys[3], attention_dim, 1, bias=False))                 # w_value
    in_dim = embedding_dim * 3
    for li, h in enumerate(mlp_hidden_dims):
        w, b = _linear(keys[4 + li], in_dim, h)
        params += [w, b,
                   jnp.ones((1, h), jnp.float32),    # bn gamma
                   jnp.zeros((1, h), jnp.float32),   # bn beta
                   jnp.zeros((1, h), jnp.float32),   # bn running_mean
                   jnp.ones((1, h), jnp.float32)]    # bn running_var
        in_dim = h
    params += list(_linear(keys[4 + len(mlp_hidden_dims)], in_dim, 1))             # output layer
    return params


# --------------------------- Pure-JAX reference -----------------------------

def din_forward_reference(cand, hist, lens, params):
    hp = lax.Precision.HIGHEST
    w_emb, b_emb, w_q, w_k, w_v = params[:5]
    mlp_params = params[5:-2]
    w_out, b_out = params[-2:]

    B, S, F = hist.shape
    cand_emb = jnp.dot(cand, w_emb, precision=hp) + b_emb
    hist_emb = jnp.dot(hist.reshape(B * S, F), w_emb, precision=hp) + b_emb
    hist_emb = hist_emb.reshape(B, S, -1)

    q_h = jnp.dot(cand_emb, w_q, precision=hp)
    k_h = jnp.einsum('bse,ea->bsa', hist_emb, w_k, precision=hp)
    hidden = jax.nn.relu(q_h[:, None, :] + k_h)
    scores = jnp.einsum('bsa,ao->bso', hidden, w_v, precision=hp)[..., 0]
    mask = jnp.arange(S)[None, :] < lens[:, None]
    scores = jnp.where(mask, scores, NEG_INF)
    attn = jax.nn.softmax(scores, axis=1)
    interest = jnp.einsum('bs,bse->be', attn, hist_emb, precision=hp)

    lens_f = lens.astype(jnp.float32)[:, None]
    avg_hist = jnp.sum(hist_emb * mask[..., None].astype(jnp.float32), axis=1) / lens_f

    x = jnp.concatenate([interest, cand_emb, avg_hist], axis=1)
    n_layers = len(mlp_params) // 6
    for li in range(n_layers):
        w, b, g, bt, rm, rv = mlp_params[6 * li: 6 * li + 6]
        x = jnp.dot(x, w, precision=hp) + b
        x = (x - rm) / jnp.sqrt(rv + BN_EPS) * g + bt
        x = jax.nn.relu(x)
    logits = jnp.dot(x, w_out, precision=hp) + b_out
    return jax.nn.sigmoid(logits)[:, 0]


# --------------------------------- Main -------------------------------------

if __name__ == "__main__":
    B, S = 16, 8
    ITEM_FEAT_DIM = 16
    EMB_DIM = 32
    ATT_DIM = 32
    MLP_DIMS = [64, 32, 16]

    root = jax.random.PRNGKey(0)
    k_cand, k_hist, k_len, k_par = jax.random.split(root, 4)

    cand = jax.random.normal(k_cand, (B, ITEM_FEAT_DIM), jnp.float32)
    hist = jax.random.normal(k_hist, (B, S, ITEM_FEAT_DIM), jnp.float32)
    lens = jax.random.randint(k_len, (B,), 1, S + 1, jnp.int32)

    params = make_din_params(k_par, ITEM_FEAT_DIM, EMB_DIM, ATT_DIM, MLP_DIMS)

    ref = jax.block_until_ready(din_forward_reference(cand, hist, lens, params))

    # f32 path: near-exact (only BN-fold / weight-fusion / MXU rounding).
    out_f32 = jax.block_until_ready(
        din_forward_pallas(cand, hist, lens, params, compute_dtype=jnp.float32))
    np.testing.assert_allclose(np.asarray(out_f32), np.asarray(ref), rtol=5e-4, atol=5e-4)

    # bf16 matmul-operand path (performance default for real workloads): loose check.
    out_bf16 = jax.block_until_ready(
        din_forward_pallas(cand, hist, lens, params, compute_dtype=jnp.bfloat16))
    np.testing.assert_allclose(np.asarray(out_bf16), np.asarray(ref), rtol=1e-1, atol=5e-2)

    print("KERNEL_OK")
</pallas_src>

<mosaic_0001>
module attributes {stable_mosaic.version = 11 : i64} {
  func.func @din_kernel(%arg0: i32, %arg1: memref<8x16xf32, #tpu.memory_space<vmem>>, %arg2: memref<64x16xf32, #tpu.memory_space<vmem>>, %arg3: memref<8x1xi32, #tpu.memory_space<vmem>>, %arg4: memref<16x32xf32, #tpu.memory_space<vmem>>, %arg5: memref<1x32xf32, #tpu.memory_space<vmem>>, %arg6: memref<16x32xf32, #tpu.memory_space<vmem>>, %arg7: memref<1x32xf32, #tpu.memory_space<vmem>>, %arg8: memref<16x32xf32, #tpu.memory_space<vmem>>, %arg9: memref<1x32xf32, #tpu.memory_space<vmem>>, %arg10: memref<32x1xf32, #tpu.memory_space<vmem>>, %arg11: memref<32x64xf32, #tpu.memory_space<vmem>>, %arg12: memref<32x64xf32, #tpu.memory_space<vmem>>, %arg13: memref<32x64xf32, #tpu.memory_space<vmem>>, %arg14: memref<1x64xf32, #tpu.memory_space<vmem>>, %arg15: memref<64x32xf32, #tpu.memory_space<vmem>>, %arg16: memref<1x32xf32, #tpu.memory_space<vmem>>, %arg17: memref<32x16xf32, #tpu.memory_space<vmem>>, %arg18: memref<1x16xf32, #tpu.memory_space<vmem>>, %arg19: memref<16x1xf32, #tpu.memory_space<vmem>>, %arg20: memref<1x1xf32, #tpu.memory_space<vmem>>, %arg21: memref<8x1xf32, #tpu.memory_space<vmem>>) attributes {dimension_semantics = [#tpu.dimension_semantics<parallel>], iteration_bounds = array<i64: 2>, scalar_prefetch = 0 : i64, scratch_operands = 0 : i64, tpu.core_type = #tpu.core_type<tc>, window_params = [{transform_indices = @transform_0, window_bounds = array<i64: 8, 16>}, {transform_indices = @transform_1, window_bounds = array<i64: 64, 16>}, {transform_indices = @transform_2, window_bounds = array<i64: 8, 1>}, {pipeline_mode = #tpu.pipeline_mode<synchronous>, transform_indices = @transform_3, window_bounds = array<i64: 16, 32>}, {pipeline_mode = #tpu.pipeline_mode<synchronous>, transform_indices = @transform_4, window_bounds = array<i64: 1, 32>}, {pipeline_mode = #tpu.pipeline_mode<synchronous>, transform_indices = @transform_5, window_bounds = array<i64: 16, 32>}, {pipeline_mode = #tpu.pipeline_mode<synchronous>, transform_indices = @transform_6, window_bounds = array<i64: 1, 32>}, {pipeline_mode = #tpu.pipeline_mode<synchronous>, transform_indices = @transform_7, window_bounds = array<i64: 16, 32>}, {pipeline_mode = #tpu.pipeline_mode<synchronous>, transform_indices = @transform_8, window_bounds = array<i64: 1, 32>}, {pipeline_mode = #tpu.pipeline_mode<synchronous>, transform_indices = @transform_9, window_bounds = array<i64: 32, 1>}, {pipeline_mode = #tpu.pipeline_mode<synchronous>, transform_indices = @transform_10, window_bounds = array<i64: 32, 64>}, {pipeline_mode = #tpu.pipeline_mode<synchronous>, transform_indices = @transform_11, window_bounds = array<i64: 32, 64>}, {pipeline_mode = #tpu.pipeline_mode<synchronous>, transform_indices = @transform_12, window_bounds = array<i64: 32, 64>}, {pipeline_mode = #tpu.pipeline_mode<synchronous>, transform_indices = @transform_13, window_bounds = array<i64: 1, 64>}, {pipeline_mode = #tpu.pipeline_mode<synchronous>, transform_indices = @transform_14, window_bounds = array<i64: 64, 32>}, {pipeline_mode = #tpu.pipeline_mode<synchronous>, transform_indices = @transform_15, window_bounds = array<i64: 1, 32>}, {pipeline_mode = #tpu.pipeline_mode<synchronous>, transform_indices = @transform_16, window_bounds = array<i64: 32, 16>}, {pipeline_mode = #tpu.pipeline_mode<synchronous>, transform_indices = @transform_17, window_bounds = array<i64: 1, 16>}, {pipeline_mode = #tpu.pipeline_mode<synchronous>, transform_indices = @transform_18, window_bounds = array<i64: 16, 1>}, {pipeline_mode = #tpu.pipeline_mode<synchronous>, transform_indices = @transform_19, window_bounds = array<i64: 1, 1>}, {transform_indices = @transform_20, window_bounds = array<i64: 8, 1>}]} {
    %c0 = arith.constant 0 : index
    %c0_0 = arith.constant 0 : index
    %0 = vector.load %arg4[%c0, %c0_0] : memref<16x32xf32, #tpu.memory_space<vmem>>, vector<16x32xf32>
    %c0_1 = arith.constant 0 : index
    %c0_2 = arith.constant 0 : index
    %1 = vector.load %arg5[%c0_1, %c0_2] : memref<1x32xf32, #tpu.memory_space<vmem>>, vector<1x32xf32>
    %c0_3 = arith.constant 0 : index
    %c0_4 = arith.constant 0 : index
    %2 = vector.load %arg6[%c0_3, %c0_4] : memref<16x32xf32, #tpu.memory_space<vmem>>, vector<16x32xf32>
    %c0_5 = arith.constant 0 : index
    %c0_6 = arith.constant 0 : index
    %3 = vector.load %arg7[%c0_5, %c0_6] : memref<1x32xf32, #tpu.memory_space<vmem>>, vector<1x32xf32>
    %c0_7 = arith.constant 0 : index
    %c0_8 = arith.constant 0 : index
    %4 = vector.load %arg8[%c0_7, %c0_8] : memref<16x32xf32, #tpu.memory_space<vmem>>, vector<16x32xf32>
    %c0_9 = arith.constant 0 : index
    %c0_10 = arith.constant 0 : index
    %5 = vector.load %arg9[%c0_9, %c0_10] : memref<1x32xf32, #tpu.memory_space<vmem>>, vector<1x32xf32>
    %c0_11 = arith.constant 0 : index
    %c0_12 = arith.constant 0 : index
    %6 = vector.load %arg10[%c0_11, %c0_12] : memref<32x1xf32, #tpu.memory_space<vmem>>, vector<32x1xf32>
    %c0_13 = arith.constant 0 : index
    %c0_14 = arith.constant 0 : index
    %7 = vector.load %arg11[%c0_13, %c0_14] : memref<32x64xf32, #tpu.memory_space<vmem>>, vector<32x64xf32>
    %c0_15 = arith.constant 0 : index
    %c0_16 = arith.constant 0 : index
    %8 = vector.load %arg12[%c0_15, %c0_16] : memref<32x64xf32, #tpu.memory_space<vmem>>, vector<32x64xf32>
    %c0_17 = arith.constant 0 : index
    %c0_18 = arith.constant 0 : index
    %9 = vector.load %arg13[%c0_17, %c0_18] : memref<32x64xf32, #tpu.memory_space<vmem>>, vector<32x64xf32>
    %c0_19 = arith.constant 0 : index
    %c0_20 = arith.constant 0 : index
    %10 = vector.load %arg14[%c0_19, %c0_20] : memref<1x64xf32, #tpu.memory_space<vmem>>, vector<1x64xf32>
    %c0_21 = arith.constant 0 : index
    %c0_22 = arith.constant 0 : index
    %11 = vector.load %arg19[%c0_21, %c0_22] : memref<16x1xf32, #tpu.memory_space<vmem>>, vector<16x1xf32>
    %c0_23 = arith.constant 0 : index
    %c0_24 = arith.constant 0 : index
    %12 = vector.load %arg20[%c0_23, %c0_24] : memref<1x1xf32, #tpu.memory_space<vmem>>, vector<1x1xf32>
    %c0_25 = arith.constant 0 : index
    %c0_26 = arith.constant 0 : index
    %13 = vector.load %arg1[%c0_25, %c0_26] : memref<8x16xf32, #tpu.memory_space<vmem>>, vector<8x16xf32>
    %c0_27 = arith.constant 0 : index
    %c0_28 = arith.constant 0 : index
    %14 = vector.load %arg2[%c0_27, %c0_28] : memref<64x16xf32, #tpu.memory_space<vmem>>, vector<64x16xf32>
    %c0_29 = arith.constant 0 : index
    %c0_30 = arith.constant 0 : index
    %15 = vector.load %arg3[%c0_29, %c0_30] : memref<8x1xi32, #tpu.memory_space<vmem>>, vector<8x1xi32>
    %cst = arith.constant dense<0.000000e+00> : vector<8x32xf32>
    %16 = tpu.matmul %13, %0, %cst {dimension_numbers = #tpu.dot_dimension_numbers<[1], [0], [0], [1], [0, 0, 1, 1], [], []>} : vector<8x16xf32>, vector<16x32xf32>, vector<8x32xf32> -> vector<8x32xf32>
    %17 = vector.broadcast %1 : vector<1x32xf32> to vector<8x32xf32>
    %18 = arith.addf %16, %17 : vector<8x32xf32>
    %cst_31 = arith.constant dense<0.000000e+00> : vector<8x32xf32>
    %19 = tpu.matmul %13, %2, %cst_31 {dimension_numbers = #tpu.dot_dimension_numbers<[1], [0], [0], [1], [0, 0, 1, 1], [], []>} : vector<8x16xf32>, vector<16x32xf32>, vector<8x32xf32> -> vector<8x32xf32>
    %20 = vector.broadcast %3 : vector<1x32xf32> to vector<8x32xf32>
    %21 = arith.addf %19, %20 : vector<8x32xf32>
    %cst_32 = arith.constant dense<0.000000e+00> : vector<64x32xf32>
    %22 = tpu.matmul %14, %0, %cst_32 {dimension_numbers = #tpu.dot_dimension_numbers<[1], [0], [0], [1], [0, 0, 1, 1], [], []>} : vector<64x16xf32>, vector<16x32xf32>, vector<64x32xf32> -> vector<64x32xf32>
    %23 = vector.broadcast %1 : vector<1x32xf32> to vector<64x32xf32>
    %24 = arith.addf %22, %23 : vector<64x32xf32>
    %cst_33 = arith.constant dense<0.000000e+00> : vector<64x32xf32>
    %25 = tpu.matmul %14, %4, %cst_33 {dimension_numbers = #tpu.dot_dimension_numbers<[1], [0], [0], [1], [0, 0, 1, 1], [], []>} : vector<64x16xf32>, vector<16x32xf32>, vector<64x32xf32> -> vector<64x32xf32>
    %26 = vector.broadcast %5 : vector<1x32xf32> to vector<64x32xf32>
    %27 = arith.addf %25, %26 : vector<64x32xf32>
    %28 = vector.shape_cast %24 : vector<64x32xf32> to vector<8x8x32xf32>
    %29 = vector.shape_cast %27 : vector<64x32xf32> to vector<8x8x32xf32>
    %30 = vector.shape_cast %21 : vector<8x32xf32> to vector<8x1x32xf32>
    %31 = vector.broadcast %30 : vector<8x1x32xf32> to vector<8x8x32xf32>
    %32 = arith.addf %31, %29 : vector<8x8x32xf32>
    %cst_34 = arith.constant 0.000000e+00 : f32
    %33 = vector.broadcast %cst_34 : f32 to vector<8x8x32xf32>
    %34 = arith.maximumf %32, %33 : vector<8x8x32xf32>
    %35 = vector.shape_cast %34 : vector<8x8x32xf32> to vector<64x32xf32>
    %cst_35 = arith.constant dense<0.000000e+00> : vector<64x1xf32>
    %36 = tpu.matmul %35, %6, %cst_35 {dimension_numbers = #tpu.dot_dimension_numbers<[1], [0], [0], [1], [0, 0, 1, 1], [], []>} : vector<64x32xf32>, vector<32x1xf32>, vector<64x1xf32> -> vector<64x1xf32>
    %37 = vector.shape_cast %36 : vector<64x1xf32> to vector<8x8x1xf32>
    %38 = tpu.iota {dimensions = array<i32: 0>} : vector<8x1xi32>
    %39 = vector.shape_cast %15 : vector<8x1xi32> to vector<8x1x1xi32>
    %40 = vector.shape_cast %38 : vector<8x1xi32> to vector<1x8x1xi32>
    %41 = vector.broadcast %40 : vector<1x8x1xi32> to vector<8x8x1xi32>
    %42 = vector.broadcast %39 : vector<8x1x1xi32> to vector<8x8x1xi32>
    %43 = arith.cmpi slt, %41, %42 : vector<8x8x1xi32>
    %cst_36 = arith.constant -1.000000e+09 : f32
    %44 = vector.broadcast %cst_36 : f32 to vector<8x8x1xf32>
    %45 = arith.select %43, %37, %44 : vector<8x8x1xi1>, vector<8x8x1xf32>
    %cst_37 = arith.constant dense<0xFF800000> : vector<8x1xf32>
    %46 = vector.multi_reduction <maximumf>, %45, %cst_37 [1] : vector<8x8x1xf32> to vector<8x1xf32>
    %47 = vector.shape_cast %46 : vector<8x1xf32> to vector<8x1x1xf32>
    %48 = vector.broadcast %47 : vector<8x1x1xf32> to vector<8x8x1xf32>
    %49 = arith.subf %45, %48 : vector<8x8x1xf32>
    %50 = math.exp %49 : vector<8x8x1xf32>
    %cst_38 = arith.constant dense<0.000000e+00> : vector<8x1xf32>
    %51 = vector.multi_reduction <add>, %50, %cst_38 [1] : vector<8x8x1xf32> to vector<8x1xf32>
    %52 = vector.shape_cast %51 : vector<8x1xf32> to vector<8x1x1xf32>
    %cst_39 = arith.constant 1.000000e+00 : f32
    %53 = vector.broadcast %cst_39 : f32 to vector<8x1x1xf32>
    %54 = arith.divf %53, %52 : vector<8x1x1xf32>
    %55 = vector.broadcast %54 : vector<8x1x1xf32> to vector<8x8x1xf32>
    %56 = arith.mulf %50, %55 : vector<8x8x1xf32>
    %57 = arith.sitofp %39 : vector<8x1x1xi32> to vector<8x1x1xf32>
    %cst_40 = arith.constant 1.000000e+00 : f32
    %58 = vector.broadcast %cst_40 : f32 to vector<8x1x1xf32>
    %59 = arith.maximumf %57, %58 : vector<8x1x1xf32>
    %60 = arith.extui %43 : vector<8x8x1xi1> to vector<8x8x1xi32>
    %61 = arith.sitofp %60 : vector<8x8x1xi32> to vector<8x8x1xf32>
    %cst_41 = arith.constant 1.000000e+00 : f32
    %62 = vector.broadcast %cst_41 : f32 to vector<8x1x1xf32>
    %63 = arith.divf %62, %59 : vector<8x1x1xf32>
    %64 = vector.broadcast %63 : vector<8x1x1xf32> to vector<8x8x1xf32>
    %65 = arith.mulf %61, %64 : vector<8x8x1xf32>
    %66 = vector.broadcast %56 : vector<8x8x1xf32> to vector<8x8x32xf32>
    %67 = arith.mulf %66, %28 : vector<8x8x32xf32>
    %cst_42 = arith.constant dense<0.000000e+00> : vector<8x32xf32>
    %68 = vector.multi_reduction <add>, %67, %cst_42 [1] : vector<8x8x32xf32> to vector<8x32xf32>
    %69 = vector.broadcast %65 : vector<8x8x1xf32> to vector<8x8x32xf32>
    %70 = arith.mulf %69, %28 : vector<8x8x32xf32>
    %cst_43 = arith.constant dense<0.000000e+00> : vector<8x32xf32>
    %71 = vector.multi_reduction <add>, %70, %cst_43 [1] : vector<8x8x32xf32> to vector<8x32xf32>
    %cst_44 = arith.constant dense<0.000000e+00> : vector<8x64xf32>
    %72 = tpu.matmul %68, %7, %cst_44 {dimension_numbers = #tpu.dot_dimension_numbers<[1], [0], [0], [1], [0, 0, 1, 1], [], []>} : vector<8x32xf32>, vector<32x64xf32>, vector<8x64xf32> -> vector<8x64xf32>
    %cst_45 = arith.constant dense<0.000000e+00> : vector<8x64xf32>
    %73 = tpu.matmul %18, %8, %cst_45 {dimension_numbers = #tpu.dot_dimension_numbers<[1], [0], [0], [1], [0, 0, 1, 1], [], []>} : vector<8x32xf32>, vector<32x64xf32>, vector<8x64xf32> -> vector<8x64xf32>
    %74 = arith.addf %72, %73 : vector<8x64xf32>
    %cst_46 = arith.constant dense<0.000000e+00> : vector<8x64xf32>
    %75 = tpu.matmul %71, %9, %cst_46 {dimension_numbers = #tpu.dot_dimension_numbers<[1], [0], [0], [1], [0, 0, 1, 1], [], []>} : vector<8x32xf32>, vector<32x64xf32>, vector<8x64xf32> -> vector<8x64xf32>
    %76 = arith.addf %74, %75 : vector<8x64xf32>
    %77 = vector.broadcast %10 : vector<1x64xf32> to vector<8x64xf32>
    %78 = arith.addf %76, %77 : vector<8x64xf32>
    %cst_47 = arith.constant 0.000000e+00 : f32
    %79 = vector.broadcast %cst_47 : f32 to vector<8x64xf32>
    %80 = arith.maximumf %78, %79 : vector<8x64xf32>
    %c0_48 = arith.constant 0 : index
    %c0_49 = arith.constant 0 : index
    %81 = vector.load %arg15[%c0_48, %c0_49] : memref<64x32xf32, #tpu.memory_space<vmem>>, vector<64x32xf32>
    %c0_50 = arith.constant 0 : index
    %c0_51 = arith.constant 0 : index
    %82 = vector.load %arg16[%c0_50, %c0_51] : memref<1x32xf32, #tpu.memory_space<vmem>>, vector<1x32xf32>
    %cst_52 = arith.constant dense<0.000000e+00> : vector<8x32xf32>
    %83 = tpu.matmul %80, %81, %cst_52 {dimension_numbers = #tpu.dot_dimension_numbers<[1], [0], [0], [1], [0, 0, 1, 1], [], []>} : vector<8x64xf32>, vector<64x32xf32>, vector<8x32xf32> -> vector<8x32xf32>
    %84 = vector.broadcast %82 : vector<1x32xf32> to vector<8x32xf32>
    %85 = arith.addf %83, %84 : vector<8x32xf32>
    %cst_53 = arith.constant 0.000000e+00 : f32
    %86 = vector.broadcast %cst_53 : f32 to vector<8x32xf32>
    %87 = arith.maximumf %85, %86 : vector<8x32xf32>
    %c0_54 = arith.constant 0 : index
    %c0_55 = arith.constant 0 : index
    %88 = vector.load %arg17[%c0_54, %c0_55] : memref<32x16xf32, #tpu.memory_space<vmem>>, vector<32x16xf32>
    %c0_56 = arith.constant 0 : index
    %c0_57 = arith.constant 0 : index
    %89 = vector.load %arg18[%c0_56, %c0_57] : memref<1x16xf32, #tpu.memory_space<vmem>>, vector<1x16xf32>
    %cst_58 = arith.constant dense<0.000000e+00> : vector<8x16xf32>
    %90 = tpu.matmul %87, %88, %cst_58 {dimension_numbers = #tpu.dot_dimension_numbers<[1], [0], [0], [1], [0, 0, 1, 1], [], []>} : vector<8x32xf32>, vector<32x16xf32>, vector<8x16xf32> -> vector<8x16xf32>
    %91 = vector.broadcast %89 : vector<1x16xf32> to vector<8x16xf32>
    %92 = arith.addf %90, %91 : vector<8x16xf32>
    %cst_59 = arith.constant 0.000000e+00 : f32
    %93 = vector.broadcast %cst_59 : f32 to vector<8x16xf32>
    %94 = arith.maximumf %92, %93 : vector<8x16xf32>
    %cst_60 = arith.constant dense<0.000000e+00> : vector<8x1xf32>
    %95 = tpu.matmul %94, %11, %cst_60 {dimension_numbers = #tpu.dot_dimension_numbers<[1], [0], [0], [1], [0, 0, 1, 1], [], []>} : vector<8x16xf32>, vector<16x1xf32>, vector<8x1xf32> -> vector<8x1xf32>
    %96 = vector.broadcast %12 : vector<1x1xf32> to vector<8x1xf32>
    %97 = arith.addf %95, %96 : vector<8x1xf32>
    %98 = arith.negf %97 : vector<8x1xf32>
    %99 = math.exp %98 : vector<8x1xf32>
    %cst_61 = arith.constant 1.000000e+00 : f32
    %100 = vector.broadcast %cst_61 : f32 to vector<8x1xf32>
    %101 = arith.addf %100, %99 : vector<8x1xf32>
    %102 = arith.divf %100, %101 : vector<8x1xf32>
    %c0_62 = arith.constant 0 : index
    %c0_63 = arith.constant 0 : index
    %103 = vector.load %arg21[%c0_62, %c0_63] : memref<8x1xf32, #tpu.memory_space<vmem>>, vector<8x1xf32>
    tpu.vector_store %arg21[%c0_62, %c0_63], %102 {strides = array<i32>} : memref<8x1xf32, #tpu.memory_space<vmem>>, vector<8x1xf32>,
    return
  }
  func.func @transform_0(%arg0: i32) -> (i32, i32) {
    %c0_i32 = arith.constant 0 : i32
    %c0_i32_0 = arith.constant 0 : i32
    return %arg0, %c0_i32 : i32, i32
  }
  func.func @transform_1(%arg0: i32) -> (i32, i32) {
    %c0_i32 = arith.constant 0 : i32
    %c0_i32_0 = arith.constant 0 : i32
    return %arg0, %c0_i32 : i32, i32
  }
  func.func @transform_2(%arg0: i32) -> (i32, i32) {
    %c0_i32 = arith.constant 0 : i32
    %c0_i32_0 = arith.constant 0 : i32
    return %arg0, %c0_i32 : i32, i32
  }
  func.func @transform_3(%arg0: i32) -> (i32, i32) {
    %c0_i32 = arith.constant 0 : i32
    %c0_i32_0 = arith.constant 0 : i32
    %c0_i32_1 = arith.constant 0 : i32
    return %c0_i32, %c0_i32_0 : i32, i32
  }
  func.func @transform_4(%arg0: i32) -> (i32, i32) {
    %c0_i32 = arith.constant 0 : i32
    %c0_i32_0 = arith.constant 0 : i32
    %c0_i32_1 = arith.constant 0 : i32
    return %c0_i32, %c0_i32_0 : i32, i32
  }
  func.func @transform_5(%arg0: i32) -> (i32, i32) {
    %c0_i32 = arith.constant 0 : i32
    %c0_i32_0 = arith.constant 0 : i32
    %c0_i32_1 = arith.constant 0 : i32
    return %c0_i32, %c0_i32_0 : i32, i32
  }
  func.func @transform_6(%arg0: i32) -> (i32, i32) {
    %c0_i32 = arith.constant 0 : i32
    %c0_i32_0 = arith.constant 0 : i32
    %c0_i32_1 = arith.constant 0 : i32
    return %c0_i32, %c0_i32_0 : i32, i32
  }
  func.func @transform_7(%arg0: i32) -> (i32, i32) {
    %c0_i32 = arith.constant 0 : i32
    %c0_i32_0 = arith.constant 0 : i32
    %c0_i32_1 = arith.constant 0 : i32
    return %c0_i32, %c0_i32_0 : i32, i32
  }
  func.func @transform_8(%arg0: i32) -> (i32, i32) {
    %c0_i32 = arith.constant 0 : i32
    %c0_i32_0 = arith.constant 0 : i32
    %c0_i32_1 = arith.constant 0 : i32
    return %c0_i32, %c0_i32_0 : i32, i32
  }
  func.func @transform_9(%arg0: i32) -> (i32, i32) {
    %c0_i32 = arith.constant 0 : i32
    %c0_i32_0 = arith.constant 0 : i32
    %c0_i32_1 = arith.constant 0 : i32
    return %c0_i32, %c0_i32_0 : i32, i32
  }
  func.func @transform_10(%arg0: i32) -> (i32, i32) {
    %c0_i32 = arith.constant 0 : i32
    %c0_i32_0 = arith.constant 0 : i32
    %c0_i32_1 = arith.constant 0 : i32
    return %c0_i32, %c0_i32_0 : i32, i32
  }
  func.func @transform_11(%arg0: i32) -> (i32, i32) {
    %c0_i32 = arith.constant 0 : i32
    %c0_i32_0 = arith.constant 0 : i32
    %c0_i32_1 = arith.constant 0 : i32
    return %c0_i32, %c0_i32_0 : i32, i32
  }
  func.func @transform_12(%arg0: i32) -> (i32, i32) {
    %c0_i32 = arith.constant 0 : i32
    %c0_i32_0 = arith.constant 0 : i32
    %c0_i32_1 = arith.constant 0 : i32
    return %c0_i32, %c0_i32_0 : i32, i32
  }
  func.func @transform_13(%arg0: i32) -> (i32, i32) {
    %c0_i32 = arith.constant 0 : i32
    %c0_i32_0 = arith.constant 0 : i32
    %c0_i32_1 = arith.constant 0 : i32
    return %c0_i32, %c0_i32_0 : i32, i32
  }
  func.func @transform_14(%arg0: i32) -> (i32, i32) {
    %c0_i32 = arith.constant 0 : i32
    %c0_i32_0 = arith.constant 0 : i32
    %c0_i32_1 = arith.constant 0 : i32
    return %c0_i32, %c0_i32_0 : i32, i32
  }
  func.func @transform_15(%arg0: i32) -> (i32, i32) {
    %c0_i32 = arith.constant 0 : i32
    %c0_i32_0 = arith.constant 0 : i32
    %c0_i32_1 = arith.constant 0 : i32
    return %c0_i32, %c0_i32_0 : i32, i32
  }
  func.func @transform_16(%arg0: i32) -> (i32, i32) {
    %c0_i32 = arith.constant 0 : i32
    %c0_i32_0 = arith.constant 0 : i32
    %c0_i32_1 = arith.constant 0 : i32
    return %c0_i32, %c0_i32_0 : i32, i32
  }
  func.func @transform_17(%arg0: i32) -> (i32, i32) {
    %c0_i32 = arith.constant 0 : i32
    %c0_i32_0 = arith.constant 0 : i32
    %c0_i32_1 = arith.constant 0 : i32
    return %c0_i32, %c0_i32_0 : i32, i32
  }
  func.func @transform_18(%arg0: i32) -> (i32, i32) {
    %c0_i32 = arith.constant 0 : i32
    %c0_i32_0 = arith.constant 0 : i32
    %c0_i32_1 = arith.constant 0 : i32
    return %c0_i32, %c0_i32_0 : i32, i32
  }
  func.func @transform_19(%arg0: i32) -> (i32, i32) {
    %c0_i32 = arith.constant 0 : i32
    %c0_i32_0 = arith.constant 0 : i32
    %c0_i32_1 = arith.constant 0 : i32
    return %c0_i32, %c0_i32_0 : i32, i32
  }
  func.func @transform_20(%arg0: i32) -> (i32, i32) {
    %c0_i32 = arith.constant 0 : i32
    %c0_i32_0 = arith.constant 0 : i32
    return %arg0, %c0_i32 : i32, i32
  }
}

</mosaic_0001>

<llo_original>
// kernel: tpu_custom_call.1
$region0: #{tpu_custom_call.1}
  #allocation0 [shape = 'u32[]', space=smem, size = 0x4, offset = 0x4, fixed_abs, tag = 'smem constant byte address 0x4 - core index']
  #allocation1 [shape = 'u32[144,128]{1,0:T(1,128)}', space=vmem, size = 0x12000, scoped, tag = 'internal scratch']
  #allocation2 [shape = 'f32[1,1]{1,0:T(1,128)S(1)}', space=vmem, size = 0x200, scoped, tag = 'scoped memory for tpu_custom_call.1']
  %s0 = inlined_call_operand.vmem [shape: f32[16,16], index: 0, kind: input, shape index: {}]
  %s1 = inlined_call_operand.vmem [shape: f32[128,16], index: 1, kind: input, shape index: {}]
  %s2 = inlined_call_operand.vmem [shape: s32[16,1], index: 2, kind: input, shape index: {}]
  %s3 = inlined_call_operand.vmem [shape: f32[16,32], index: 3, kind: input, shape index: {}]
  %s4 = inlined_call_operand.vmem [shape: f32[1,32], index: 4, kind: input, shape index: {}]
  %s5 = inlined_call_operand.vmem [shape: f32[16,32], index: 5, kind: input, shape index: {}]
  %s6 = inlined_call_operand.vmem [shape: f32[1,32], index: 6, kind: input, shape index: {}]
  %s7 = inlined_call_operand.vmem [shape: f32[16,32], index: 7, kind: input, shape index: {}]
  %s8 = inlined_call_operand.vmem [shape: f32[1,32], index: 8, kind: input, shape index: {}]
  %s9 = inlined_call_operand.vmem [shape: f32[32,1], index: 9, kind: input, shape index: {}]
  %s10 = inlined_call_operand.vmem [shape: f32[32,64], index: 10, kind: input, shape index: {}]
  %s11 = inlined_call_operand.vmem [shape: f32[32,64], index: 11, kind: input, shape index: {}]
  %s12 = inlined_call_operand.vmem [shape: f32[32,64], index: 12, kind: input, shape index: {}]
  %s13 = inlined_call_operand.vmem [shape: f32[1,64], index: 13, kind: input, shape index: {}]
  %s14 = inlined_call_operand.vmem [shape: f32[64,32], index: 14, kind: input, shape index: {}]
  %s15 = inlined_call_operand.vmem [shape: f32[1,32], index: 15, kind: input, shape index: {}]
  %s16 = inlined_call_operand.vmem [shape: f32[32,16], index: 16, kind: input, shape index: {}]
  %s17 = inlined_call_operand.vmem [shape: f32[1,16], index: 17, kind: input, shape index: {}]
  %s18 = inlined_call_operand.vmem [shape: f32[16,1], index: 18, kind: input, shape index: {}]
  %s19 = inlined_call_operand.<no memory space> [shape: f32[1,1], index: 19, kind: input, shape index: {}]
  %s20 = inlined_call_operand.vmem [shape: f32[16,1], index: 20, kind: output, shape index: {}]
  %s21 = sld [smem:[#allocation0]]
  $region113: #{tpu_custom_call.1} parent=0
    _
  %s23 = ssub.s32 1, %s21
  %s24 = scalar_select 0, %s23, %s21
  %v25 = vstv %s19
  %26 = vst [vmem:[#allocation2] sm:$0x1] %v25
  loop: start=0, step=1, limit=4
  $region2: #{tpu_custom_call.1} parent=0 // loop_pre_header
    _
  $region3: #{tpu_custom_call.1} parent=0 // loop_header
    %s28 = sphi 0, %s32
    %p29 = scmp.ge.s32.totalorder %s28, 4
    %s38 = sphi 0, %s40
    %s41 = sphi 0, %s38
    %s42 = sphi 0, %s41
    %s58 = sphi 0, %s42
    %s64 = sphi 0, %s66
    %s67 = sphi 0, %s64
    %s68 = sphi 0, %s67
    %s84 = sphi 0, %s68
    %s90 = sphi 0, %s92
    %s93 = sphi 0, %s90
    %s94 = sphi 0, %s93
    %s110 = sphi 0, %s94
    %s114 = sphi 0, %s114
    %s116 = sphi 0, %s114
    %s117 = sphi 0, %s116
    %s131 = sphi 0, %s117
    %s135 = sphi 0, %s135
    %s137 = sphi 0, %s135
    %s138 = sphi 0, %s137
    %s152 = sphi 0, %s138
    %s156 = sphi 0, %s156
    %s158 = sphi 0, %s156
    %s159 = sphi 0, %s158
    %s173 = sphi 0, %s159
    %s177 = sphi 0, %s177
    %s179 = sphi 0, %s177
    %s180 = sphi 0, %s179
    %s194 = sphi 0, %s180
    %s198 = sphi 0, %s198
    %s200 = sphi 0, %s198
    %s201 = sphi 0, %s200
    %s215 = sphi 0, %s201
    %s219 = sphi 0, %s219
    %s221 = sphi 0, %s219
    %s222 = sphi 0, %s221
    %s236 = sphi 0, %s222
    %s240 = sphi 0, %s240
    %s242 = sphi 0, %s240
    %s243 = sphi 0, %s242
    %s257 = sphi 0, %s243
    %s261 = sphi 0, %s261
    %s263 = sphi 0, %s261
    %s264 = sphi 0, %s263
    %s278 = sphi 0, %s264
    %s282 = sphi 0, %s282
    %s284 = sphi 0, %s282
    %s285 = sphi 0, %s284
    %s299 = sphi 0, %s285
    %s303 = sphi 0, %s303
    %s305 = sphi 0, %s303
    %s306 = sphi 0, %s305
    %s320 = sphi 0, %s306
    %s324 = sphi 0, %s324
    %s326 = sphi 0, %s324
    %s327 = sphi 0, %s326
    %s341 = sphi 0, %s327
    %s345 = sphi 0, %s345
    %s347 = sphi 0, %s345
    %s348 = sphi 0, %s347
    %s362 = sphi 0, %s348
    %s366 = sphi 0, %s366
    %s368 = sphi 0, %s366
    %s369 = sphi 0, %s368
    %s383 = sphi 0, %s369
    %s387 = sphi 0, %s387
    %s389 = sphi 0, %s387
    %s390 = sphi 0, %s389
    %s404 = sphi 0, %s390
    %s408 = sphi 0, %s408
    %s410 = sphi 0, %s408
    %s411 = sphi 0, %s410
    %s425 = sphi 0, %s411
    %s429 = sphi 0, %s429
    %s431 = sphi 0, %s429
    %s432 = sphi 0, %s431
    %s446 = sphi 0, %s432
    %s450 = sphi 0, %s450
    %s452 = sphi 0, %s450
    %s453 = sphi 0, %s452
    %s467 = sphi 0, %s453
    %s473 = sphi 0, %s475
    %s476 = sphi 0, %s473
    %s477 = sphi 0, %s476
    %s493 = sphi 0, %s477
  $region4: #{tpu_custom_call.1} parent=0 // loop_header_branch
    %31 = sbr.rel (%p29) target = $region8
  $region5: #{tpu_custom_call.1} parent=0 // loop_body
    %s33 = ssub.s32 %s28, 1
    %s34 = ssub.s32 %s28, 2
    %s35 = sadd.s32 %s28, 1
    %s36 = ssub.s32 %s28, %s35
    %p37 = scmp.eq.s32.totalorder %s36, 0
    %s39 = sadd.s32 %s38, 1
    %s40 = scalar_select %p37, %s38, %s39
    %p43 = pneg %p37
    %p44 = scmp.eq.s32.totalorder %s28, 1
    %p45 = por %p43, %p44
    %p46 = scmp.ne.s32.totalorder %s38, %s41
    %p47 = scmp.eq.s32.totalorder %s28, 0
    %p48 = por %p46, %p47
    %p49 = scmp.ne.s32.totalorder %s38, %s41
    %p50 = scmp.eq.s32.totalorder %s33, 1
    %p51 = por %p49, %p50
    %p52 = scmp.ne.s32.totalorder %s41, %s42
    %p53 = scmp.eq.s32.totalorder %s33, 0
    %p54 = por %p52, %p53
    %p55 = scmp.ne.s32.totalorder %s41, %s42
    %p56 = scmp.eq.s32.totalorder %s34, 1
    %p57 = por %p55, %p56
    %p59 = scmp.ne.s32.totalorder %s42, %s58
    %p60 = scmp.eq.s32.totalorder %s34, 0
    %p61 = por %p59, %p60
    %s62 = ssub.s32 %s28, %s35
    %p63 = scmp.eq.s32.totalorder %s62, 0
    %s65 = sadd.s32 %s64, 1
    %s66 = scalar_select %p63, %s64, %s65
    %p69 = pneg %p63
    %p70 = scmp.eq.s32.totalorder %s28, 1
    %p71 = por %p69, %p70
    %p72 = scmp.ne.s32.totalorder %s64, %s67
    %p73 = scmp.eq.s32.totalorder %s28, 0
    %p74 = por %p72, %p73
    %p75 = scmp.ne.s32.totalorder %s64, %s67
    %p76 = scmp.eq.s32.totalorder %s33, 1
    %p77 = por %p75, %p76
    %p78 = scmp.ne.s32.totalorder %s67, %s68
    %p79 = scmp.eq.s32.totalorder %s33, 0
    %p80 = por %p78, %p79
    %p81 = scmp.ne.s32.totalorder %s67, %s68
    %p82 = scmp.eq.s32.totalorder %s34, 1
    %p83 = por %p81, %p82
    %p85 = scmp.ne.s32.totalorder %s68, %s84
    %p86 = scmp.eq.s32.totalorder %s34, 0
    %p87 = por %p85, %p86
    %s88 = ssub.s32 %s28, %s35
    %p89 = scmp.eq.s32.totalorder %s88, 0
    %s91 = sadd.s32 %s90, 1
    %s92 = scalar_select %p89, %s90, %s91
    %p95 = pneg %p89
    %p96 = scmp.eq.s32.totalorder %s28, 1
    %p97 = por %p95, %p96
    %p98 = scmp.ne.s32.totalorder %s90, %s93
    %p99 = scmp.eq.s32.totalorder %s28, 0
    %p100 = por %p98, %p99
    %p101 = scmp.ne.s32.totalorder %s90, %s93
    %p102 = scmp.eq.s32.totalorder %s33, 1
    %p103 = por %p101, %p102
    %p104 = scmp.ne.s32.totalorder %s93, %s94
    %p105 = scmp.eq.s32.totalorder %s33, 0
    %p106 = por %p104, %p105
    %p107 = scmp.ne.s32.totalorder %s93, %s94
    %p108 = scmp.eq.s32.totalorder %s34, 1
    %p109 = por %p107, %p108
    %p111 = scmp.ne.s32.totalorder %s94, %s110
    %p112 = scmp.eq.s32.totalorder %s34, 0
    %p113 = por %p111, %p112
    %s115 = sadd.s32 %s114, 1
    %p118 = scmp.eq.s32.totalorder %s28, 1
    %p119 = scmp.ne.s32.totalorder %s114, %s116
    %p120 = scmp.eq.s32.totalorder %s28, 0
    %p121 = por %p119, %p120
    %p122 = scmp.ne.s32.totalorder %s114, %s116
    %p123 = scmp.eq.s32.totalorder %s33, 1
    %p124 = por %p122, %p123
    %p125 = scmp.ne.s32.totalorder %s116, %s117
    %p126 = scmp.eq.s32.totalorder %s33, 0
    %p127 = por %p125, %p126
    %p128 = scmp.ne.s32.totalorder %s116, %s117
    %p129 = scmp.eq.s32.totalorder %s34, 1
    %p130 = por %p128, %p129
    %p132 = scmp.ne.s32.totalorder %s117, %s131
    %p133 = scmp.eq.s32.totalorder %s34, 0
    %p134 = por %p132, %p133
    %s136 = sadd.s32 %s135, 1
    %p139 = scmp.eq.s32.totalorder %s28, 1
    %p140 = scmp.ne.s32.totalorder %s135, %s137
    %p141 = scmp.eq.s32.totalorder %s28, 0
    %p142 = por %p140, %p141
    %p143 = scmp.ne.s32.totalorder %s135, %s137
    %p144 = scmp.eq.s32.totalorder %s33, 1
    %p145 = por %p143, %p144
    %p146 = scmp.ne.s32.totalorder %s137, %s138
    %p147 = scmp.eq.s32.totalorder %s33, 0
    %p148 = por %p146, %p147
    %p149 = scmp.ne.s32.totalorder %s137, %s138
    %p150 = scmp.eq.s32.totalorder %s34, 1
    %p151 = por %p149, %p150
    %p153 = scmp.ne.s32.totalorder %s138, %s152
    %p154 = scmp.eq.s32.totalorder %s34, 0
    %p155 = por %p153, %p154
    %s157 = sadd.s32 %s156, 1
    %p160 = scmp.eq.s32.totalorder %s28, 1
    %p161 = scmp.ne.s32.totalorder %s156, %s158
    %p162 = scmp.eq.s32.totalorder %s28, 0
    %p163 = por %p161, %p162
    %p164 = scmp.ne.s32.totalorder %s156, %s158
    %p165 = scmp.eq.s32.totalorder %s33, 1
    %p166 = por %p164, %p165
    %p167 = scmp.ne.s32.totalorder %s158, %s159
    %p168 = scmp.eq.s32.totalorder %s33, 0
    %p169 = por %p167, %p168
    %p170 = scmp.ne.s32.totalorder %s158, %s159
    %p171 = scmp.eq.s32.totalorder %s34, 1
    %p172 = por %p170, %p171
    %p174 = scmp.ne.s32.totalorder %s159, %s173
    %p175 = scmp.eq.s32.totalorder %s34, 0
    %p176 = por %p174, %p175
    %s178 = sadd.s32 %s177, 1
    %p181 = scmp.eq.s32.totalorder %s28, 1
    %p182 = scmp.ne.s32.totalorder %s177, %s179
    %p183 = scmp.eq.s32.totalorder %s28, 0
    %p184 = por %p182, %p183
    %p185 = scmp.ne.s32.totalorder %s177, %s179
    %p186 = scmp.eq.s32.totalorder %s33, 1
    %p187 = por %p185, %p186
    %p188 = scmp.ne.s32.totalorder %s179, %s180
    %p189 = scmp.eq.s32.totalorder %s33, 0
    %p190 = por %p188, %p189
    %p191 = scmp.ne.s32.totalorder %s179, %s180
    %p192 = scmp.eq.s32.totalorder %s34, 1
    %p193 = por %p191, %p192
    %p195 = scmp.ne.s32.totalorder %s180, %s194
    %p196 = scmp.eq.s32.totalorder %s34, 0
    %p197 = por %p195, %p196
    %s199 = sadd.s32 %s198, 1
    %p202 = scmp.eq.s32.totalorder %s28, 1
    %p203 = scmp.ne.s32.totalorder %s198, %s200
    %p204 = scmp.eq.s32.totalorder %s28, 0
    %p205 = por %p203, %p204
    %p206 = scmp.ne.s32.totalorder %s198, %s200
    %p207 = scmp.eq.s32.totalorder %s33, 1
    %p208 = por %p206, %p207
    %p209 = scmp.ne.s32.totalorder %s200, %s201
    %p210 = scmp.eq.s32.totalorder %s33, 0
    %p211 = por %p209, %p210
    %p212 = scmp.ne.s32.totalorder %s200, %s201
    %p213 = scmp.eq.s32.totalorder %s34, 1
    %p214 = por %p212, %p213
    %p216 = scmp.ne.s32.totalorder %s201, %s215
    %p217 = scmp.eq.s32.totalorder %s34, 0
    %p218 = por %p216, %p217
    %s220 = sadd.s32 %s219, 1
    %p223 = scmp.eq.s32.totalorder %s28, 1
    %p224 = scmp.ne.s32.totalorder %s219, %s221
    %p225 = scmp.eq.s32.totalorder %s28, 0
    %p226 = por %p224, %p225
    %p227 = scmp.ne.s32.totalorder %s219, %s221
    %p228 = scmp.eq.s32.totalorder %s33, 1
    %p229 = por %p227, %p228
    %p230 = scmp.ne.s32.totalorder %s221, %s222
    %p231 = scmp.eq.s32.totalorder %s33, 0
    %p232 = por %p230, %p231
    %p233 = scmp.ne.s32.totalorder %s221, %s222
    %p234 = scmp.eq.s32.totalorder %s34, 1
    %p235 = por %p233, %p234
    %p237 = scmp.ne.s32.totalorder %s222, %s236
    %p238 = scmp.eq.s32.totalorder %s34, 0
    %p239 = por %p237, %p238
    %s241 = sadd.s32 %s240, 1
    %p244 = scmp.eq.s32.totalorder %s28, 1
    %p245 = scmp.ne.s32.totalorder %s240, %s242
    %p246 = scmp.eq.s32.totalorder %s28, 0
    %p247 = por %p245, %p246
    %p248 = scmp.ne.s32.totalorder %s240, %s242
    %p249 = scmp.eq.s32.totalorder %s33, 1
    %p250 = por %p248, %p249
    %p251 = scmp.ne.s32.totalorder %s242, %s243
    %p252 = scmp.eq.s32.totalorder %s33, 0
    %p253 = por %p251, %p252
    %p254 = scmp.ne.s32.totalorder %s242, %s243
    %p255 = scmp.eq.s32.totalorder %s34, 1
    %p256 = por %p254, %p255
    %p258 = scmp.ne.s32.totalorder %s243, %s257
    %p259 = scmp.eq.s32.totalorder %s34, 0
    %p260 = por %p258, %p259
    %s262 = sadd.s32 %s261, 1
    %p265 = scmp.eq.s32.totalorder %s28, 1
    %p266 = scmp.ne.s32.totalorder %s261, %s263
    %p267 = scmp.eq.s32.totalorder %s28, 0
    %p268 = por %p266, %p267
    %p269 = scmp.ne.s32.totalorder %s261, %s263
    %p270 = scmp.eq.s32.totalorder %s33, 1
    %p271 = por %p269, %p270
    %p272 = scmp.ne.s32.totalorder %s263, %s264
    %p273 = scmp.eq.s32.totalorder %s33, 0
    %p274 = por %p272, %p273
    %p275 = scmp.ne.s32.totalorder %s263, %s264
    %p276 = scmp.eq.s32.totalorder %s34, 1
    %p277 = por %p275, %p276
    %p279 = scmp.ne.s32.totalorder %s264, %s278
    %p280 = scmp.eq.s32.totalorder %s34, 0
    %p281 = por %p279, %p280
    %s283 = sadd.s32 %s282, 1
    %p286 = scmp.eq.s32.totalorder %s28, 1
    %p287 = scmp.ne.s32.totalorder %s282, %s284
    %p288 = scmp.eq.s32.totalorder %s28, 0
    %p289 = por %p287, %p288
    %p290 = scmp.ne.s32.totalorder %s282, %s284
    %p291 = scmp.eq.s32.totalorder %s33, 1
    %p292 = por %p290, %p291
    %p293 = scmp.ne.s32.totalorder %s284, %s285
    %p294 = scmp.eq.s32.totalorder %s33, 0
    %p295 = por %p293, %p294
    %p296 = scmp.ne.s32.totalorder %s284, %s285
    %p297 = scmp.eq.s32.totalorder %s34, 1
    %p298 = por %p296, %p297
    %p300 = scmp.ne.s32.totalorder %s285, %s299
    %p301 = scmp.eq.s32.totalorder %s34, 0
    %p302 = por %p300, %p301
    %s304 = sadd.s32 %s303, 1
    %p307 = scmp.eq.s32.totalorder %s28, 1
    %p308 = scmp.ne.s32.totalorder %s303, %s305
    %p309 = scmp.eq.s32.totalorder %s28, 0
    %p310 = por %p308, %p309
    %p311 = scmp.ne.s32.totalorder %s303, %s305
    %p312 = scmp.eq.s32.totalorder %s33, 1
    %p313 = por %p311, %p312
    %p314 = scmp.ne.s32.totalorder %s305, %s306
    %p315 = scmp.eq.s32.totalorder %s33, 0
    %p316 = por %p314, %p315
    %p317 = scmp.ne.s32.totalorder %s305, %s306
    %p318 = scmp.eq.s32.totalorder %s34, 1
    %p319 = por %p317, %p318
    %p321 = scmp.ne.s32.totalorder %s306, %s320
    %p322 = scmp.eq.s32.totalorder %s34, 0
    %p323 = por %p321, %p322
    %s325 = sadd.s32 %s324, 1
    %p328 = scmp.eq.s32.totalorder %s28, 1
    %p329 = scmp.ne.s32.totalorder %s324, %s326
    %p330 = scmp.eq.s32.totalorder %s28, 0
    %p331 = por %p329, %p330
    %p332 = scmp.ne.s32.totalorder %s324, %s326
    %p333 = scmp.eq.s32.totalorder %s33, 1
    %p334 = por %p332, %p333
    %p335 = scmp.ne.s32.totalorder %s326, %s327
    %p336 = scmp.eq.s32.totalorder %s33, 0
    %p337 = por %p335, %p336
    %p338 = scmp.ne.s32.totalorder %s326, %s327
    %p339 = scmp.eq.s32.totalorder %s34, 1
    %p340 = por %p338, %p339
    %p342 = scmp.ne.s32.totalorder %s327, %s341
    %p343 = scmp.eq.s32.totalorder %s34, 0
    %p344 = por %p342, %p343
    %s346 = sadd.s32 %s345, 1
    %p349 = scmp.eq.s32.totalorder %s28, 1
    %p350 = scmp.ne.s32.totalorder %s345, %s347
    %p351 = scmp.eq.s32.totalorder %s28, 0
    %p352 = por %p350, %p351
    %p353 = scmp.ne.s32.totalorder %s345, %s347
    %p354 = scmp.eq.s32.totalorder %s33, 1
    %p355 = por %p353, %p354
    %p356 = scmp.ne.s32.totalorder %s347, %s348
    %p357 = scmp.eq.s32.totalorder %s33, 0
    %p358 = por %p356, %p357
    %p359 = scmp.ne.s32.totalorder %s347, %s348
    %p360 = scmp.eq.s32.totalorder %s34, 1
    %p361 = por %p359, %p360
    %p363 = scmp.ne.s32.totalorder %s348, %s362
    %p364 = scmp.eq.s32.totalorder %s34, 0
    %p365 = por %p363, %p364
    %s367 = sadd.s32 %s366, 1
    %p370 = scmp.eq.s32.totalorder %s28, 1
    %p371 = scmp.ne.s32.totalorder %s366, %s368
    %p372 = scmp.eq.s32.totalorder %s28, 0
    %p373 = por %p371, %p372
    %p374 = scmp.ne.s32.totalorder %s366, %s368
    %p375 = scmp.eq.s32.totalorder %s33, 1
    %p376 = por %p374, %p375
    %p377 = scmp.ne.s32.totalorder %s368, %s369
    %p378 = scmp.eq.s32.totalorder %s33, 0
    %p379 = por %p377, %p378
    %p380 = scmp.ne.s32.totalorder %s368, %s369
    %p381 = scmp.eq.s32.totalorder %s34, 1
    %p382 = por %p380, %p381
    %p384 = scmp.ne.s32.totalorder %s369, %s383
    %p385 = scmp.eq.s32.totalorder %s34, 0
    %p386 = por %p384, %p385
    %s388 = sadd.s32 %s387, 1
    %p391 = scmp.eq.s32.totalorder %s28, 1
    %p392 = scmp.ne.s32.totalorder %s387, %s389
    %p393 = scmp.eq.s32.totalorder %s28, 0
    %p394 = por %p392, %p393
    %p395 = scmp.ne.s32.totalorder %s387, %s389
    %p396 = scmp.eq.s32.totalorder %s33, 1
    %p397 = por %p395, %p396
    %p398 = scmp.ne.s32.totalorder %s389, %s390
    %p399 = scmp.eq.s32.totalorder %s33, 0
    %p400 = por %p398, %p399
    %p401 = scmp.ne.s32.totalorder %s389, %s390
    %p402 = scmp.eq.s32.totalorder %s34, 1
    %p403 = por %p401, %p402
    %p405 = scmp.ne.s32.totalorder %s390, %s404
    %p406 = scmp.eq.s32.totalorder %s34, 0
    %p407 = por %p405, %p406
    %s409 = sadd.s32 %s408, 1
    %p412 = scmp.eq.s32.totalorder %s28, 1
    %p413 = scmp.ne.s32.totalorder %s408, %s410
    %p414 = scmp.eq.s32.totalorder %s28, 0
    %p415 = por %p413, %p414
    %p416 = scmp.ne.s32.totalorder %s408, %s410
    %p417 = scmp.eq.s32.totalorder %s33, 1
    %p418 = por %p416, %p417
    %p419 = scmp.ne.s32.totalorder %s410, %s411
    %p420 = scmp.eq.s32.totalorder %s33, 0
    %p421 = por %p419, %p420
    %p422 = scmp.ne.s32.totalorder %s410, %s411
    %p423 = scmp.eq.s32.totalorder %s34, 1
    %p424 = por %p422, %p423
    %p426 = scmp.ne.s32.totalorder %s411, %s425
    %p427 = scmp.eq.s32.totalorder %s34, 0
    %p428 = por %p426, %p427
    %s430 = sadd.s32 %s429, 1
    %p433 = scmp.eq.s32.totalorder %s28, 1
    %p434 = scmp.ne.s32.totalorder %s429, %s431
    %p435 = scmp.eq.s32.totalorder %s28, 0
    %p436 = por %p434, %p435
    %p437 = scmp.ne.s32.totalorder %s429, %s431
    %p438 = scmp.eq.s32.totalorder %s33, 1
    %p439 = por %p437, %p438
    %p440 = scmp.ne.s32.totalorder %s431, %s432
    %p441 = scmp.eq.s32.totalorder %s33, 0
    %p442 = por %p440, %p441
    %p443 = scmp.ne.s32.totalorder %s431, %s432
    %p444 = scmp.eq.s32.totalorder %s34, 1
    %p445 = por %p443, %p444
    %p447 = scmp.ne.s32.totalorder %s432, %s446
    %p448 = scmp.eq.s32.totalorder %s34, 0
    %p449 = por %p447, %p448
    %s451 = sadd.s32 %s450, 1
    %p454 = scmp.eq.s32.totalorder %s28, 1
    %p455 = scmp.ne.s32.totalorder %s450, %s452
    %p456 = scmp.eq.s32.totalorder %s28, 0
    %p457 = por %p455, %p456
    %p458 = scmp.ne.s32.totalorder %s450, %s452
    %p459 = scmp.eq.s32.totalorder %s33, 1
    %p460 = por %p458, %p459
    %p461 = scmp.ne.s32.totalorder %s452, %s453
    %p462 = scmp.eq.s32.totalorder %s33, 0
    %p463 = por %p461, %p462
    %p464 = scmp.ne.s32.totalorder %s452, %s453
    %p465 = scmp.eq.s32.totalorder %s34, 1
    %p466 = por %p464, %p465
    %p468 = scmp.ne.s32.totalorder %s453, %s467
    %p469 = scmp.eq.s32.totalorder %s34, 0
    %p470 = por %p468, %p469
    %s471 = ssub.s32 %s28, %s35
    %p472 = scmp.eq.s32.totalorder %s471, 0
    %s474 = sadd.s32 %s473, 1
    %s475 = scalar_select %p472, %s473, %s474
    %p478 = pneg %p472
    %p479 = scmp.eq.s32.totalorder %s28, 1
    %p480 = por %p478, %p479
    %p481 = scmp.ne.s32.totalorder %s473, %s476
    %p482 = scmp.eq.s32.totalorder %s28, 0
    %p483 = por %p481, %p482
    %p484 = scmp.ne.s32.totalorder %s473, %s476
    %p485 = scmp.eq.s32.totalorder %s33, 1
    %p486 = por %p484, %p485
    %p487 = scmp.ne.s32.totalorder %s476, %s477
    %p488 = scmp.eq.s32.totalorder %s33, 0
    %p489 = por %p487, %p488
    %p490 = scmp.ne.s32.totalorder %s476, %s477
    %p491 = scmp.eq.s32.totalorder %s34, 1
    %p492 = por %p490, %p491
    %p494 = scmp.ne.s32.totalorder %s477, %s493
    %p495 = scmp.eq.s32.totalorder %s34, 0
    %p496 = por %p494, %p495
    %p497 = scmp.le.s32.totalorder 1, %s28
    %p498 = scmp.lt.s32.totalorder %s28, 3
    %p499 = pnand %p497, %p498
    %p500 = pneg %p499
    // Predicated region
    $region9: #{tpu_custom_call.1} parent=5 // pred_check
      _
    $region10: #{tpu_custom_call.1} parent=5 // pred_check_branch
      %502 = sbr.rel (%p499) target = $region12
    $region11: #{tpu_custom_call.1} parent=5 // pred_region
      %s503 = ssub.s32 %s28, 1
      // Predicated region
      $region13: #{tpu_custom_call.1} parent=11 // pred_check
        %p504 = pneg %p127
      $region14: #{tpu_custom_call.1} parent=11 // pred_check_branch
        %506 = sbr.rel (%p504) target = $region16
      $region15: #{tpu_custom_call.1} parent=11 // pred_region
        _
      $region16: #{tpu_custom_call.1} parent=11 // pred_fallthru
        _
      // Predicated region
      $region17: #{tpu_custom_call.1} parent=11 // pred_check
        %p507 = pneg %p148
      $region18: #{tpu_custom_call.1} parent=11 // pred_check_branch
        %509 = sbr.rel (%p507) target = $region20
      $region19: #{tpu_custom_call.1} parent=11 // pred_region
        _
      $region20: #{tpu_custom_call.1} parent=11 // pred_fallthru
        _
      // Predicated region
      $region21: #{tpu_custom_call.1} parent=11 // pred_check
        %p510 = pneg %p169
      $region22: #{tpu_custom_call.1} parent=11 // pred_check_branch
        %512 = sbr.rel (%p510) target = $region24
      $region23: #{tpu_custom_call.1} parent=11 // pred_region
        _
      $region24: #{tpu_custom_call.1} parent=11 // pred_fallthru
        _
      // Predicated region
      $region25: #{tpu_custom_call.1} parent=11 // pred_check
        %p513 = pneg %p190
      $region26: #{tpu_custom_call.1} parent=11 // pred_check_branch
        %515 = sbr.rel (%p513) target = $region28
      $region27: #{tpu_custom_call.1} parent=11 // pred_region
        _
      $region28: #{tpu_custom_call.1} parent=11 // pred_fallthru
        _
      // Predicated region
      $region29: #{tpu_custom_call.1} parent=11 // pred_check
        %p516 = pneg %p211
      $region30: #{tpu_custom_call.1} parent=11 // pred_check_branch
        %518 = sbr.rel (%p516) target = $region32
      $region31: #{tpu_custom_call.1} parent=11 // pred_region
        _
      $region32: #{tpu_custom_call.1} parent=11 // pred_fallthru
        _
      // Predicated region
      $region33: #{tpu_custom_call.1} parent=11 // pred_check
        %p519 = pneg %p232
      $region34: #{tpu_custom_call.1} parent=11 // pred_check_branch
        %521 = sbr.rel (%p519) target = $region36
      $region35: #{tpu_custom_call.1} parent=11 // pred_region
        _
      $region36: #{tpu_custom_call.1} parent=11 // pred_fallthru
        _
      // Predicated region
      $region37: #{tpu_custom_call.1} parent=11 // pred_check
        %p522 = pneg %p253
      $region38: #{tpu_custom_call.1} parent=11 // pred_check_branch
        %524 = sbr.rel (%p522) target = $region40
      $region39: #{tpu_custom_call.1} parent=11 // pred_region
        _
      $region40: #{tpu_custom_call.1} parent=11 // pred_fallthru
        _
      // Predicated region
      $region41: #{tpu_custom_call.1} parent=11 // pred_check
        %p525 = pneg %p274
      $region42: #{tpu_custom_call.1} parent=11 // pred_check_branch
        %527 = sbr.rel (%p525) target = $region44
      $region43: #{tpu_custom_call.1} parent=11 // pred_region
        _
      $region44: #{tpu_custom_call.1} parent=11 // pred_fallthru
        _
      // Predicated region
      $region45: #{tpu_custom_call.1} parent=11 // pred_check
        %p528 = pneg %p295
      $region46: #{tpu_custom_call.1} parent=11 // pred_check_branch
        %530 = sbr.rel (%p528) target = $region48
      $region47: #{tpu_custom_call.1} parent=11 // pred_region
        _
      $region48: #{tpu_custom_call.1} parent=11 // pred_fallthru
        _
      // Predicated region
      $region49: #{tpu_custom_call.1} parent=11 // pred_check
        %p531 = pneg %p316
      $region50: #{tpu_custom_call.1} parent=11 // pred_check_branch
        %533 = sbr.rel (%p531) target = $region52
      $region51: #{tpu_custom_call.1} parent=11 // pred_region
        _
      $region52: #{tpu_custom_call.1} parent=11 // pred_fallthru
        _
      // Predicated region
      $region53: #{tpu_custom_call.1} parent=11 // pred_check
        %p534 = pneg %p337
      $region54: #{tpu_custom_call.1} parent=11 // pred_check_branch
        %536 = sbr.rel (%p534) target = $region56
      $region55: #{tpu_custom_call.1} parent=11 // pred_region
        _
      $region56: #{tpu_custom_call.1} parent=11 // pred_fallthru
        _
      // Predicated region
      $region57: #{tpu_custom_call.1} parent=11 // pred_check
        %p537 = pneg %p358
      $region58: #{tpu_custom_call.1} parent=11 // pred_check_branch
        %539 = sbr.rel (%p537) target = $region60
      $region59: #{tpu_custom_call.1} parent=11 // pred_region
        _
      $region60: #{tpu_custom_call.1} parent=11 // pred_fallthru
        _
      // Predicated region
      $region61: #{tpu_custom_call.1} parent=11 // pred_check
        %p540 = pneg %p379
      $region62: #{tpu_custom_call.1} parent=11 // pred_check_branch
        %542 = sbr.rel (%p540) target = $region64
      $region63: #{tpu_custom_call.1} parent=11 // pred_region
        _
      $region64: #{tpu_custom_call.1} parent=11 // pred_fallthru
        _
      // Predicated region
      $region65: #{tpu_custom_call.1} parent=11 // pred_check
        %p543 = pneg %p400
      $region66: #{tpu_custom_call.1} parent=11 // pred_check_branch
        %545 = sbr.rel (%p543) target = $region68
      $region67: #{tpu_custom_call.1} parent=11 // pred_region
        _
      $region68: #{tpu_custom_call.1} parent=11 // pred_fallthru
        _
      // Predicated region
      $region69: #{tpu_custom_call.1} parent=11 // pred_check
        %p546 = pneg %p421
      $region70: #{tpu_custom_call.1} parent=11 // pred_check_branch
        %548 = sbr.rel (%p546) target = $region72
      $region71: #{tpu_custom_call.1} parent=11 // pred_region
        _
      $region72: #{tpu_custom_call.1} parent=11 // pred_fallthru
        _
      // Predicated region
      $region73: #{tpu_custom_call.1} parent=11 // pred_check
        %p549 = pneg %p442
      $region74: #{tpu_custom_call.1} parent=11 // pred_check_branch
        %551 = sbr.rel (%p549) target = $region76
      $region75: #{tpu_custom_call.1} parent=11 // pred_region
        _
      $region76: #{tpu_custom_call.1} parent=11 // pred_fallthru
        _
      // Predicated region
      $region77: #{tpu_custom_call.1} parent=11 // pred_check
        %p552 = pneg %p463
      $region78: #{tpu_custom_call.1} parent=11 // pred_check_branch
        %554 = sbr.rel (%p552) target = $region80
      $region79: #{tpu_custom_call.1} parent=11 // pred_region
        _
      $region80: #{tpu_custom_call.1} parent=11 // pred_fallthru
        _
    $region12: #{tpu_custom_call.1} parent=5 // pred_fallthru
      _
    %p555 = scmp.lt.s32.totalorder %s28, 2
    // Predicated region
    $region81: #{tpu_custom_call.1} parent=5 // pred_check
      %p556 = pneg %p555
    $region82: #{tpu_custom_call.1} parent=5 // pred_check_branch
      %558 = sbr.rel (%p556) target = $region84
    $region83: #{tpu_custom_call.1} parent=5 // pred_region
      // Predicated region
      $region85: #{tpu_custom_call.1} parent=83 // pred_check
        %p559 = pneg %p48
      $region86: #{tpu_custom_call.1} parent=83 // pred_check_branch
        %561 = sbr.rel (%p559) target = $region88
      $region87: #{tpu_custom_call.1} parent=83 // pred_region
        %p562 = scmp.lt.s32.totalorder %s28, 1
        %s563 = scalar_select %p562, %s28, 1
        %s564 = smul.addr %s563, 8
        %s565 = scalar_lea.vmem %s0, %s564
      $region88: #{tpu_custom_call.1} parent=83 // pred_fallthru
        _
      // Predicated region
      $region89: #{tpu_custom_call.1} parent=83 // pred_check
        %p566 = pneg %p74
      $region90: #{tpu_custom_call.1} parent=83 // pred_check_branch
        %568 = sbr.rel (%p566) target = $region92
      $region91: #{tpu_custom_call.1} parent=83 // pred_region
        %s569 = smul.u32 8, %s28
        %p570 = scmp.lt.s32.totalorder %s569, 15
        %s571 = scalar_select %p570, %s569, 15
        %s572 = smul.addr %s571, 8
        %s573 = scalar_lea.vmem %s1, %s572
        %s574 = smul.u32 8, %s28
      $region92: #{tpu_custom_call.1} parent=83 // pred_fallthru
        _
      // Predicated region
      $region93: #{tpu_custom_call.1} parent=83 // pred_check
        %p575 = pneg %p100
      $region94: #{tpu_custom_call.1} parent=83 // pred_check_branch
        %577 = sbr.rel (%p575) target = $region96
      $region95: #{tpu_custom_call.1} parent=83 // pred_region
        %p578 = scmp.lt.s32.totalorder %s28, 1
        %s579 = scalar_select %p578, %s28, 1
        %s580 = smul.addr %s579, 8
        %s581 = scalar_lea.vmem %s2, %s580
      $region96: #{tpu_custom_call.1} parent=83 // pred_fallthru
        _
    $region84: #{tpu_custom_call.1} parent=5 // pred_fallthru
      _
    %p582 = scmp.le.s32.totalorder 1, %s28
    %p583 = scmp.lt.s32.totalorder %s28, 3
    %p584 = pnand %p582, %p583
    %p585 = pneg %p584
    // Predicated region
    $region97: #{tpu_custom_call.1} parent=5 // pred_check
      _
    $region98: #{tpu_custom_call.1} parent=5 // pred_check_branch
      %587 = sbr.rel (%p584) target = $region100
    $region99: #{tpu_custom_call.1} parent=5 // pred_region
      %s588 = ssub.s32 %s28, 1
      %p589 = scmp.lt.s32.totalorder %s33, 1
      %s590 = scalar_select %p589, %s33, 1
      %s591 = smul.addr %s590, 8
      %s592 = scalar_lea.vmem %s0, %s591
      %p593 = pneg %p54
      %p594 = pneg %p51
      %s595 = smul.u32 8, %s33
      %p596 = scmp.lt.s32.totalorder %s595, 15
      %s597 = scalar_select %p596, %s595, 15
      %s598 = smul.addr %s597, 8
      %s599 = scalar_lea.vmem %s1, %s598
      %p600 = pneg %p80
      %p601 = pneg %p77
      %p602 = scmp.lt.s32.totalorder %s33, 1
      %s603 = scalar_select %p602, %s33, 1
      %s604 = smul.addr %s603, 8
      %s605 = scalar_lea.vmem %s2, %s604
      %p606 = pneg %p106
      %p607 = pneg %p103
      %p608 = pneg %p127
      %p609 = pneg %p124
      %p610 = pneg %p148
      %p611 = pneg %p145
      %p612 = pneg %p169
      %p613 = pneg %p166
      %p614 = pneg %p190
      %p615 = pneg %p187
      %p616 = pneg %p211
      %p617 = pneg %p208
      %p618 = pneg %p232
      %p619 = pneg %p229
      %p620 = pneg %p253
      %p621 = pneg %p250
      %p622 = pneg %p274
      %p623 = pneg %p271
      %p624 = pneg %p295
      %p625 = pneg %p292
      %p626 = pneg %p316
      %p627 = pneg %p313
      %p628 = pneg %p337
      %p629 = pneg %p334
      %p630 = pneg %p358
      %p631 = pneg %p355
      %p632 = pneg %p379
      %p633 = pneg %p376
      %p634 = pneg %p400
      %p635 = pneg %p397
      %p636 = pneg %p421
      %p637 = pneg %p418
      %p638 = pneg %p442
      %p639 = pneg %p439
      %p640 = pneg %p463
      %p641 = pneg %p460
      %p642 = pneg %p489
      %p643 = pneg %p486
      %p644 = scmp.lt.s32.totalorder %s33, 1
      %s645 = scalar_select %p644, %s33, 1
      %s646 = smul.addr %s645, 8
      %s647 = scalar_lea.vmem %s20, %s646
      %p648 = scmp.lt.s32.totalorder %s33, 1
      %s649 = scalar_select %p648, %s33, 1
      %s650 = smul.addr %s649, 8
      %s651 = scalar_lea.vmem %s0, %s650
      %s652 = smul.u32 8, %s33
      %p653 = scmp.lt.s32.totalorder %s652, 15
      %s654 = scalar_select %p653, %s652, 15
      %s655 = smul.addr %s654, 8
      %s656 = scalar_lea.vmem %s1, %s655
      %s657 = smul.u32 8, %s33
      %p658 = scmp.lt.s32.totalorder %s33, 1
      %s659 = scalar_select %p658, %s33, 1
      %s660 = smul.addr %s659, 8
      %s661 = scalar_lea.vmem %s2, %s660
      %p662 = scmp.lt.s32.totalorder %s33, 1
      %s663 = scalar_select %p662, %s33, 1
      %s664 = smul.addr %s663, 8
      %s665 = scalar_lea.vmem %s20, %s664
      %v666 = vld [vmem:[%s3] sm:$0xff]
      %v667 = vld [vmem:[%s3 + $0x8] sm:$0xff]
      %v668 = vld [vmem:[%s4] sm:$0x1]
      %v669 = vld [vmem:[%s5] sm:$0xff]
      %v670 = vld [vmem:[%s5 + $0x8] sm:$0xff]
      %v671 = vld [vmem:[%s6] sm:$0x1]
      %v672 = vld [vmem:[%s7] sm:$0xff]
      %v673 = vld [vmem:[%s7 + $0x8] sm:$0xff]
      %v674 = vld [vmem:[%s8] sm:$0x1]
      %v675 = vld [vmem:[%s9] sm:$0xff]
      %v676 = vld [vmem:[%s9 + $0x8] sm:$0xff]
      %v677 = vld [vmem:[%s9 + $0x10] sm:$0xff]
      %v678 = vld [vmem:[%s9 + $0x18] sm:$0xff]
      %v679 = vld [vmem:[%s10] sm:$0xff]
      %v680 = vld [vmem:[%s10 + $0x8] sm:$0xff]
      %v681 = vld [vmem:[%s10 + $0x10] sm:$0xff]
      %v682 = vld [vmem:[%s10 + $0x18] sm:$0xff]
      %v683 = vld [vmem:[%s11] sm:$0xff]
      %v684 = vld [vmem:[%s11 + $0x8] sm:$0xff]
      %v685 = vld [vmem:[%s11 + $0x10] sm:$0xff]
      %v686 = vld [vmem:[%s11 + $0x18] sm:$0xff]
      %v687 = vld [vmem:[%s12] sm:$0xff]
      %v688 = vld [vmem:[%s12 + $0x8] sm:$0xff]
      %v689 = vld [vmem:[%s12 + $0x10] sm:$0xff]
      %v690 = vld [vmem:[%s12 + $0x18] sm:$0xff]
      %v691 = vld [vmem:[%s13] sm:$0x1]
      %v692 = vld [vmem:[%s18] sm:$0xff]
      %v693 = vld [vmem:[%s18 + $0x8] sm:$0xff]
      %v694 = vld [vmem:[#allocation2] sm:$0x1]
      %v695 = vld [vmem:[%s651] sm:$0xff]
      %v696 = vld [vmem:[%s656] sm:$0xff]
      %v697 = vld [vmem:[%s656 + $0x8] sm:$0xff]
      %v698 = vld [vmem:[%s656 + $0x10] sm:$0xff]
      %v699 = vld [vmem:[%s656 + $0x18] sm:$0xff]
      %v700 = vld [vmem:[%s656 + $0x20] sm:$0xff]
      %v701 = vld [vmem:[%s656 + $0x28] sm:$0xff]
      %v702 = vld [vmem:[%s656 + $0x30] sm:$0xff]
      %v703 = vld [vmem:[%s656 + $0x38] sm:$0xff]
      %v704 = vld [vmem:[%s661] sm:$0xff]
      %v706 = vlaneseq
      %v707 = vshrl.u32 %v706, 7
      %v708 = vsub.s32 0, %v707
      %v709 = vrot.slane %v668, %v708
      %vm711 = vcmask 130048
      %v713 = vsel %vm711, %v695, 0
      %715 = vmatprep.subr.mxu0 0.0
      %716 = vmatpush1.msra.mxu0 0.0
      %717 = vmatprep.subr.mxu0 0.0
      %718 = vmatpush1.msra.mxu0 0.0
      %719 = vmatprep.subr.mxu0 0.0
      %720 = vmatpush1.msra.mxu0 0.0
      %721 = vmatprep.subr.mxu0 0.0
      %722 = vmatpush1.msra.mxu0 0.0
      %723 = vmatprep.subr.mxu0 0.0
      %724 = vmatpush1.msra.mxu0 0.0
      %725 = vmatprep.subr.mxu0 0.0
      %726 = vmatpush1.msra.mxu0 0.0
      %727 = vmatprep.subr.mxu0 0.0
      %728 = vmatpush1.msra.mxu0 0.0
      %729 = vmatprep.subr.mxu0 0.0
      %730 = vmatpush1.msra.mxu0 0.0
      %731 = vmatprep.subr.mxu0 0.0
      %732 = vmatpush1.msra.mxu0 0.0
      %733 = vmatprep.subr.mxu0 0.0
      %734 = vmatpush1.msra.mxu0 0.0
      %735 = vmatprep.subr.mxu0 0.0
      %736 = vmatpush1.msra.mxu0 0.0
      %737 = vmatprep.subr.mxu0 0.0
      %738 = vmatpush1.msra.mxu0 0.0
      %739 = vmatprep.subr.mxu0 0.0
      %740 = vmatpush1.msra.mxu0 0.0
      %741 = vmatprep.subr.mxu0 0.0
      %742 = vmatpush1.msra.mxu0 0.0
      %743 = vmatprep.subr.mxu0 0.0
      %744 = vmatpush1.msra.mxu0 %v667
      %745 = vmatprep.subr.mxu0 0.0
      %746 = vmatpush1.msra.mxu0 %v666
      %747 = vmatprep.subr.mxu0 0.0
      %748 = vmatpush2.msra.mxu0 0.0
      %749 = vmatprep.subr.mxu0 0.0
      %750 = vmatpush2.msra.mxu0 0.0
      %751 = vmatprep.subr.mxu0 0.0
      %752 = vmatpush2.msra.mxu0 0.0
      %753 = vmatprep.subr.mxu0 0.0
      %754 = vmatpush2.msra.mxu0 0.0
      %755 = vmatprep.subr.mxu0 0.0
      %756 = vmatpush2.msra.mxu0 0.0
      %757 = vmatprep.subr.mxu0 0.0
      %758 = vmatpush2.msra.mxu0 0.0
      %759 = vmatprep.subr.mxu0 0.0
      %760 = vmatpush2.msra.mxu0 0.0
      %761 = vmatprep.subr.mxu0 0.0
      %762 = vmatpush2.msra.mxu0 0.0
      %763 = vmatprep.subr.mxu0 0.0
      %764 = vmatpush2.msra.mxu0 0.0
      %765 = vmatprep.subr.mxu0 0.0
      %766 = vmatpush2.msra.mxu0 0.0
      %767 = vmatprep.subr.mxu0 0.0
      %768 = vmatpush2.msra.mxu0 0.0
      %769 = vmatprep.subr.mxu0 0.0
      %770 = vmatpush2.msra.mxu0 0.0
      %771 = vmatprep.subr.mxu0 0.0
      %772 = vmatpush2.msra.mxu0 0.0
      %773 = vmatprep.subr.mxu0 0.0
      %774 = vmatpush2.msra.mxu0 0.0
      %775 = vmatprep.subr.mxu0 0.0
      %776 = vmatpush2.msra.mxu0 0.0
      %777 = vmatprep.subr.mxu0 0.0
      %778 = vmatpush2.msra.mxu0 0.0
      %779 = vmatprep.mubr.f32.mxu0 0.0
      %780 = vmatmul.mubr.f32.gmra.mxu0 %v713
      %v781 = vpop.f32.mrf.mxu0
      %v782 = vadd.f32 %v709, %v781
      %v783 = vpop.f32.mrf.mxu0
      %784 = vdwg.mxu0
      %v786 = vlaneseq
      %v787 = vshrl.u32 %v786, 7
      %v788 = vsub.s32 0, %v787
      %v789 = vrot.slane %v671, %v788
      %791 = vmatprep.subr.mxu0 0.0
      %792 = vmatpush1.msra.mxu0 0.0
      %793 = vmatprep.subr.mxu0 0.0
      %794 = vmatpush1.msra.mxu0 0.0
      %795 = vmatprep.subr.mxu0 0.0
      %796 = vmatpush1.msra.mxu0 0.0
      %797 = vmatprep.subr.mxu0 0.0
      %798 = vmatpush1.msra.mxu0 0.0
      %799 = vmatprep.subr.mxu0 0.0
      %800 = vmatpush1.msra.mxu0 0.0
      %801 = vmatprep.subr.mxu0 0.0
      %802 = vmatpush1.msra.mxu0 0.0
      %803 = vmatprep.subr.mxu0 0.0
      %804 = vmatpush1.msra.mxu0 0.0
      %805 = vmatprep.subr.mxu0 0.0
      %806 = vmatpush1.msra.mxu0 0.0
      %807 = vmatprep.subr.mxu0 0.0
      %808 = vmatpush1.msra.mxu0 0.0
      %809 = vmatprep.subr.mxu0 0.0
      %810 = vmatpush1.msra.mxu0 0.0
      %811 = vmatprep.subr.mxu0 0.0
      %812 = vmatpush1.msra.mxu0 0.0
      %813 = vmatprep.subr.mxu0 0.0
      %814 = vmatpush1.msra.mxu0 0.0
      %815 = vmatprep.subr.mxu0 0.0
      %816 = vmatpush1.msra.mxu0 0.0
      %817 = vmatprep.subr.mxu0 0.0
      %818 = vmatpush1.msra.mxu0 0.0
      %819 = vmatprep.subr.mxu0 0.0
      %820 = vmatpush1.msra.mxu0 %v670
      %821 = vmatprep.subr.mxu0 0.0
      %822 = vmatpush1.msra.mxu0 %v669
      %823 = vmatprep.subr.mxu0 0.0
      %824 = vmatpush2.msra.mxu0 0.0
      %825 = vmatprep.subr.mxu0 0.0
      %826 = vmatpush2.msra.mxu0 0.0
      %827 = vmatprep.subr.mxu0 0.0
      %828 = vmatpush2.msra.mxu0 0.0
      %829 = vmatprep.subr.mxu0 0.0
      %830 = vmatpush2.msra.mxu0 0.0
      %831 = vmatprep.subr.mxu0 0.0
      %832 = vmatpush2.msra.mxu0 0.0
      %833 = vmatprep.subr.mxu0 0.0
      %834 = vmatpush2.msra.mxu0 0.0
      %835 = vmatprep.subr.mxu0 0.0
      %836 = vmatpush2.msra.mxu0 0.0
      %837 = vmatprep.subr.mxu0 0.0
      %838 = vmatpush2.msra.mxu0 0.0
      %839 = vmatprep.subr.mxu0 0.0
      %840 = vmatpush2.msra.mxu0 0.0
      %841 = vmatprep.subr.mxu0 0.0
      %842 = vmatpush2.msra.mxu0 0.0
      %843 = vmatprep.subr.mxu0 0.0
      %844 = vmatpush2.msra.mxu0 0.0
      %845 = vmatprep.subr.mxu0 0.0
      %846 = vmatpush2.msra.mxu0 0.0
      %847 = vmatprep.subr.mxu0 0.0
      %848 = vmatpush2.msra.mxu0 0.0
      %849 = vmatprep.subr.mxu0 0.0
      %850 = vmatpush2.msra.mxu0 0.0
      %851 = vmatprep.subr.mxu0 0.0
      %852 = vmatpush2.msra.mxu0 0.0
      %853 = vmatprep.subr.mxu0 0.0
      %854 = vmatpush2.msra.mxu0 0.0
      %855 = vmatprep.mubr.f32.mxu0 0.0
      %856 = vmatmul.mubr.f32.gmra.mxu0 %v713
      %v857 = vpop.f32.mrf.mxu0
      %v858 = vadd.f32 %v789, %v857
      %v859 = vpop.f32.mrf.mxu0
      %860 = vdwg.mxu0
      %v862 = vsel %vm711, %v696, 0
      %v865 = vsel %vm711, %v697, 0
      %v868 = vsel %vm711, %v698, 0
      %v871 = vsel %vm711, %v699, 0
      %v874 = vsel %vm711, %v700, 0
      %v877 = vsel %vm711, %v701, 0
      %v880 = vsel %vm711, %v702, 0
      %v883 = vsel %vm711, %v703, 0
      %885 = vmatprep.subr.mxu0 0.0
      %886 = vmatpush1.msra.mxu0 0.0
      %887 = vmatprep.subr.mxu0 0.0
      %888 = vmatpush1.msra.mxu0 0.0
      %889 = vmatprep.subr.mxu0 0.0
      %890 = vmatpush1.msra.mxu0 0.0
      %891 = vmatprep.subr.mxu0 0.0
      %892 = vmatpush1.msra.mxu0 0.0
      %893 = vmatprep.subr.mxu0 0.0
      %894 = vmatpush1.msra.mxu0 0.0
      %895 = vmatprep.subr.mxu0 0.0
      %896 = vmatpush1.msra.mxu0 0.0
      %897 = vmatprep.subr.mxu0 0.0
      %898 = vmatpush1.msra.mxu0 0.0
      %899 = vmatprep.subr.mxu0 0.0
      %900 = vmatpush1.msra.mxu0 0.0
      %901 = vmatprep.subr.mxu0 0.0
      %902 = vmatpush1.msra.mxu0 0.0
      %903 = vmatprep.subr.mxu0 0.0
      %904 = vmatpush1.msra.mxu0 0.0
      %905 = vmatprep.subr.mxu0 0.0
      %906 = vmatpush1.msra.mxu0 0.0
      %907 = vmatprep.subr.mxu0 0.0
      %908 = vmatpush1.msra.mxu0 0.0
      %909 = vmatprep.subr.mxu0 0.0
      %910 = vmatpush1.msra.mxu0 0.0
      %911 = vmatprep.subr.mxu0 0.0
      %912 = vmatpush1.msra.mxu0 0.0
      %913 = vmatprep.subr.mxu0 0.0
      %914 = vmatpush1.msra.mxu0 %v667
      %915 = vmatprep.subr.mxu0 0.0
      %916 = vmatpush1.msra.mxu0 %v666
      %917 = vmatprep.subr.mxu0 0.0
      %918 = vmatpush2.msra.mxu0 0.0
      %919 = vmatprep.subr.mxu0 0.0
      %920 = vmatpush2.msra.mxu0 0.0
      %921 = vmatprep.subr.mxu0 0.0
      %922 = vmatpush2.msra.mxu0 0.0
      %923 = vmatprep.subr.mxu0 0.0
      %924 = vmatpush2.msra.mxu0 0.0
      %925 = vmatprep.subr.mxu0 0.0
      %926 = vmatpush2.msra.mxu0 0.0
      %927 = vmatprep.subr.mxu0 0.0
      %928 = vmatpush2.msra.mxu0 0.0
      %929 = vmatprep.subr.mxu0 0.0
      %930 = vmatpush2.msra.mxu0 0.0
      %931 = vmatprep.subr.mxu0 0.0
      %932 = vmatpush2.msra.mxu0 0.0
      %933 = vmatprep.subr.mxu0 0.0
      %934 = vmatpush2.msra.mxu0 0.0
      %935 = vmatprep.subr.mxu0 0.0
      %936 = vmatpush2.msra.mxu0 0.0
      %937 = vmatprep.subr.mxu0 0.0
      %938 = vmatpush2.msra.mxu0 0.0
      %939 = vmatprep.subr.mxu0 0.0
      %940 = vmatpush2.msra.mxu0 0.0
      %941 = vmatprep.subr.mxu0 0.0
      %942 = vmatpush2.msra.mxu0 0.0
      %943 = vmatprep.subr.mxu0 0.0
      %944 = vmatpush2.msra.mxu0 0.0
      %945 = vmatprep.subr.mxu0 0.0
      %946 = vmatpush2.msra.mxu0 0.0
      %947 = vmatprep.subr.mxu0 0.0
      %948 = vmatpush2.msra.mxu0 0.0
      %949 = vmatprep.mubr.f32.mxu0 0.0
      %950 = vmatmul.mubr.f32.gmra.mxu0 %v862
      %v951 = vpop.f32.mrf.mxu0
      %v952 = vadd.f32 %v709, %v951
      %v953 = vpop.f32.mrf.mxu0
      %954 = vmatprep.mubr.f32.mxu0 0.0
      %955 = vmatmul.mubr.f32.gmra.mxu0 %v865
      %v956 = vpop.f32.mrf.mxu0
      %v957 = vadd.f32 %v709, %v956
      %v958 = vpop.f32.mrf.mxu0
      %959 = vmatprep.mubr.f32.mxu0 0.0
      %960 = vmatmul.mubr.f32.gmra.mxu0 %v868
      %v961 = vpop.f32.mrf.mxu0
      %v962 = vadd.f32 %v709, %v961
      %v963 = vpop.f32.mrf.mxu0
      %964 = vmatprep.mubr.f32.mxu0 0.0
      %965 = vmatmul.mubr.f32.gmra.mxu0 %v871
      %v966 = vpop.f32.mrf.mxu0
      %v967 = vadd.f32 %v709, %v966
      %v968 = vpop.f32.mrf.mxu0
      %969 = vmatprep.mubr.f32.mxu0 0.0
      %970 = vmatmul.mubr.f32.gmra.mxu0 %v874
      %v971 = vpop.f32.mrf.mxu0
      %v972 = vadd.f32 %v709, %v971
      %v973 = vpop.f32.mrf.mxu0
      %974 = vmatprep.mubr.f32.mxu0 0.0
      %975 = vmatmul.mubr.f32.gmra.mxu0 %v877
      %v976 = vpop.f32.mrf.mxu0
      %v977 = vadd.f32 %v709, %v976
      %v978 = vpop.f32.mrf.mxu0
      %979 = vmatprep.mubr.f32.mxu0 0.0
      %980 = vmatmul.mubr.f32.gmra.mxu0 %v880
      %v981 = vpop.f32.mrf.mxu0
      %v982 = vadd.f32 %v709, %v981
      %v983 = vpop.f32.mrf.mxu0
      %984 = vmatprep.mubr.f32.mxu0 0.0
      %985 = vmatmul.mubr.f32.gmra.mxu0 %v883
      %v986 = vpop.f32.mrf.mxu0
      %v987 = vadd.f32 %v709, %v986
      %v988 = vpop.f32.mrf.mxu0
      %989 = vdwg.mxu0
      %v991 = vlaneseq
      %v992 = vshrl.u32 %v991, 7
      %v993 = vsub.s32 0, %v992
      %v994 = vrot.slane %v674, %v993
      %996 = vmatprep.subr.mxu0 0.0
      %997 = vmatpush1.msra.mxu0 0.0
      %998 = vmatprep.subr.mxu0 0.0
      %999 = vmatpush1.msra.mxu0 0.0
      %1000 = vmatprep.subr.mxu0 0.0
      %1001 = vmatpush1.msra.mxu0 0.0
      %1002 = vmatprep.subr.mxu0 0.0
      %1003 = vmatpush1.msra.mxu0 0.0
      %1004 = vmatprep.subr.mxu0 0.0
      %1005 = vmatpush1.msra.mxu0 0.0
      %1006 = vmatprep.subr.mxu0 0.0
      %1007 = vmatpush1.msra.mxu0 0.0
      %1008 = vmatprep.subr.mxu0 0.0
      %1009 = vmatpush1.msra.mxu0 0.0
      %1010 = vmatprep.subr.mxu0 0.0
      %1011 = vmatpush1.msra.mxu0 0.0
      %1012 = vmatprep.subr.mxu0 0.0
      %1013 = vmatpush1.msra.mxu0 0.0
      %1014 = vmatprep.subr.mxu0 0.0
      %1015 = vmatpush1.msra.mxu0 0.0
      %1016 = vmatprep.subr.mxu0 0.0
      %1017 = vmatpush1.msra.mxu0 0.0
      %1018 = vmatprep.subr.mxu0 0.0
      %1019 = vmatpush1.msra.mxu0 0.0
      %1020 = vmatprep.subr.mxu0 0.0
      %1021 = vmatpush1.msra.mxu0 0.0
      %1022 = vmatprep.subr.mxu0 0.0
      %1023 = vmatpush1.msra.mxu0 0.0
      %1024 = vmatprep.subr.mxu0 0.0
      %1025 = vmatpush1.msra.mxu0 %v673
      %1026 = vmatprep.subr.mxu0 0.0
      %1027 = vmatpush1.msra.mxu0 %v672
      %1028 = vmatprep.subr.mxu0 0.0
      %1029 = vmatpush2.msra.mxu0 0.0
      %1030 = vmatprep.subr.mxu0 0.0
      %1031 = vmatpush2.msra.mxu0 0.0
      %1032 = vmatprep.subr.mxu0 0.0
      %1033 = vmatpush2.msra.mxu0 0.0
      %1034 = vmatprep.subr.mxu0 0.0
      %1035 = vmatpush2.msra.mxu0 0.0
      %1036 = vmatprep.subr.mxu0 0.0
      %1037 = vmatpush2.msra.mxu0 0.0
      %1038 = vmatprep.subr.mxu0 0.0
      %1039 = vmatpush2.msra.mxu0 0.0
      %1040 = vmatprep.subr.mxu0 0.0
      %1041 = vmatpush2.msra.mxu0 0.0
      %1042 = vmatprep.subr.mxu0 0.0
      %1043 = vmatpush2.msra.mxu0 0.0
      %1044 = vmatprep.subr.mxu0 0.0
      %1045 = vmatpush2.msra.mxu0 0.0
      %1046 = vmatprep.subr.mxu0 0.0
      %1047 = vmatpush2.msra.mxu0 0.0
      %1048 = vmatprep.subr.mxu0 0.0
      %1049 = vmatpush2.msra.mxu0 0.0
      %1050 = vmatprep.subr.mxu0 0.0
      %1051 = vmatpush2.msra.mxu0 0.0
      %1052 = vmatprep.subr.mxu0 0.0
      %1053 = vmatpush2.msra.mxu0 0.0
      %1054 = vmatprep.subr.mxu0 0.0
      %1055 = vmatpush2.msra.mxu0 0.0
      %1056 = vmatprep.subr.mxu0 0.0
      %1057 = vmatpush2.msra.mxu0 0.0
      %1058 = vmatprep.subr.mxu0 0.0
      %1059 = vmatpush2.msra.mxu0 0.0
      %1060 = vmatprep.mubr.f32.mxu0 0.0
      %1061 = vmatmul.mubr.f32.gmra.mxu0 %v862
      %v1062 = vpop.f32.mrf.mxu0
      %v1063 = vadd.f32 %v994, %v1062
      %v1064 = vpop.f32.mrf.mxu0
      %1065 = vmatprep.mubr.f32.mxu0 0.0
      %1066 = vmatmul.mubr.f32.gmra.mxu0 %v865
      %v1067 = vpop.f32.mrf.mxu0
      %v1068 = vadd.f32 %v994, %v1067
      %v1069 = vpop.f32.mrf.mxu0
      %1070 = vmatprep.mubr.f32.mxu0 0.0
      %1071 = vmatmul.mubr.f32.gmra.mxu0 %v868
      %v1072 = vpop.f32.mrf.mxu0
      %v1073 = vadd.f32 %v994, %v1072
      %v1074 = vpop.f32.mrf.mxu0
      %1075 = vmatprep.mubr.f32.mxu0 0.0
      %1076 = vmatmul.mubr.f32.gmra.mxu0 %v871
      %v1077 = vpop.f32.mrf.mxu0
      %v1078 = vadd.f32 %v994, %v1077
      %v1079 = vpop.f32.mrf.mxu0
      %1080 = vmatprep.mubr.f32.mxu0 0.0
      %1081 = vmatmul.mubr.f32.gmra.mxu0 %v874
      %v1082 = vpop.f32.mrf.mxu0
      %v1083 = vadd.f32 %v994, %v1082
      %v1084 = vpop.f32.mrf.mxu0
      %1085 = vmatprep.mubr.f32.mxu0 0.0
      %1086 = vmatmul.mubr.f32.gmra.mxu0 %v877
      %v1087 = vpop.f32.mrf.mxu0
      %v1088 = vadd.f32 %v994, %v1087
      %v1089 = vpop.f32.mrf.mxu0
      %1090 = vmatprep.mubr.f32.mxu0 0.0
      %1091 = vmatmul.mubr.f32.gmra.mxu0 %v880
      %v1092 = vpop.f32.mrf.mxu0
      %v1093 = vadd.f32 %v994, %v1092
      %v1094 = vpop.f32.mrf.mxu0
      %1095 = vmatprep.mubr.f32.mxu0 0.0
      %1096 = vmatmul.mubr.f32.gmra.mxu0 %v883
      %v1097 = vpop.f32.mrf.mxu0
      %v1098 = vadd.f32 %v994, %v1097
      %v1099 = vpop.f32.mrf.mxu0
      %1100 = vdwg.mxu0
      %v1102 = vcombine.high %v858, %v858
      %v1104 = vunpack.c.l.s4 1966171168
      %v1105 = vunpack.c.0.s8 %v1104
      %v1106 = vlaneseq
      %v1107 = vshrl.u32 %v1106, 7
      %v1108 = vsub.s32 %v1105, %v1107
      %v1109 = vrot.slane %v858, %v1108
      %v1111 = vunpack.c.l.s4 1966171168
      %v1112 = vunpack.c.0.s8 %v1111
      %v1113 = vlaneseq
      %v1114 = vshrl.u32 %v1113, 7
      %v1115 = vsub.s32 %v1112, %v1114
      %v1116 = vrot.slane %v1102, %v1115
      %v1117 = vcombine.high %v1109, %v1109
      %v1118 = vcombine.high %v1116, %v1116
      %v1120 = vunpack.c.l.s4 1966171168
      %v1121 = vunpack.c.0.s8 %v1120
      %v1122 = vlaneseq
      %v1123 = vshrl.u32 %v1122, 7
      %v1124 = vsub.s32 %v1121, %v1123
      %v1125 = vrot.slane %v1109, %v1124
      %v1127 = vunpack.c.l.s4 1966171168
      %v1128 = vunpack.c.0.s8 %v1127
      %v1129 = vlaneseq
      %v1130 = vshrl.u32 %v1129, 7
      %v1131 = vsub.s32 %v1128, %v1130
      %v1132 = vrot.slane %v1116, %v1131
      %v1134 = vunpack.c.l.s4 1966171168
      %v1135 = vunpack.c.0.s8 %v1134
      %v1136 = vlaneseq
      %v1137 = vshrl.u32 %v1136, 7
      %v1138 = vsub.s32 %v1135, %v1137
      %v1139 = vrot.slane %v1117, %v1138
      %v1141 = vunpack.c.l.s4 1966171168
      %v1142 = vunpack.c.0.s8 %v1141
      %v1143 = vlaneseq
      %v1144 = vshrl.u32 %v1143, 7
      %v1145 = vsub.s32 %v1142, %v1144
      %v1146 = vrot.slane %v1118, %v1145
      %v1147 = vcombine.high %v1125, %v1125
      %v1148 = vcombine.high %v1132, %v1132
      %v1149 = vcombine.high %v1139, %v1139
      %v1150 = vcombine.high %v1146, %v1146
      %v1151 = vlaneseq
      %v1152 = vshrl.u32 %v1151, 7
      %v1153 = vsub.s32 0, %v1152
      %v1154 = vrot.slane %v1125, %v1153
      %v1155 = vlaneseq
      %v1156 = vshrl.u32 %v1155, 7
      %v1157 = vsub.s32 0, %v1156
      %v1158 = vrot.slane %v1139, %v1157
      %v1159 = vlaneseq
      %v1160 = vshrl.u32 %v1159, 7
      %v1161 = vsub.s32 0, %v1160
      %v1162 = vrot.slane %v1147, %v1161
      %v1163 = vlaneseq
      %v1164 = vshrl.u32 %v1163, 7
      %v1165 = vsub.s32 0, %v1164
      %v1166 = vrot.slane %v1149, %v1165
      %v1167 = vlaneseq
      %v1168 = vshrl.u32 %v1167, 7
      %v1169 = vsub.s32 0, %v1168
      %v1170 = vrot.slane %v1132, %v1169
      %v1171 = vlaneseq
      %v1172 = vshrl.u32 %v1171, 7
      %v1173 = vsub.s32 0, %v1172
      %v1174 = vrot.slane %v1146, %v1173
      %v1175 = vlaneseq
      %v1176 = vshrl.u32 %v1175, 7
      %v1177 = vsub.s32 0, %v1176
      %v1178 = vrot.slane %v1148, %v1177
      %v1179 = vlaneseq
      %v1180 = vshrl.u32 %v1179, 7
      %v1181 = vsub.s32 0, %v1180
      %v1182 = vrot.slane %v1150, %v1181
      %v1191 = vadd.f32 %v1154, %v1063
      %v1192 = vadd.f32 %v1158, %v1068
      %v1193 = vadd.f32 %v1162, %v1073
      %v1194 = vadd.f32 %v1166, %v1078
      %v1195 = vadd.f32 %v1170, %v1083
      %v1196 = vadd.f32 %v1174, %v1088
      %v1197 = vadd.f32 %v1178, %v1093
      %v1198 = vadd.f32 %v1182, %v1098
      %v1199 = vmax.f32 %v1191, 0.0
      %v1200 = vmax.f32 %v1192, 0.0
      %v1201 = vmax.f32 %v1193, 0.0
      %v1202 = vmax.f32 %v1194, 0.0
      %v1203 = vmax.f32 %v1195, 0.0
      %v1204 = vmax.f32 %v1196, 0.0
      %v1205 = vmax.f32 %v1197, 0.0
      %v1206 = vmax.f32 %v1198, 0.0
      %vm1207 = vcmask 261120
      %v1209 = vsel %vm1207, %v1199, 0
      %v1212 = vsel %vm1207, %v1200, 0
      %v1215 = vsel %vm1207, %v1201, 0
      %v1218 = vsel %vm1207, %v1202, 0
      %v1221 = vsel %vm1207, %v1203, 0
      %v1224 = vsel %vm1207, %v1204, 0
      %v1227 = vsel %vm1207, %v1205, 0
      %v1230 = vsel %vm1207, %v1206, 0
      %1232 = vmatprep.subr.mxu0 0.0
      %1233 = vmatpush1.msra.mxu0 0.0
      %1234 = vmatprep.subr.mxu0 0.0
      %1235 = vmatpush1.msra.mxu0 0.0
      %1236 = vmatprep.subr.mxu0 0.0
      %1237 = vmatpush1.msra.mxu0 0.0
      %1238 = vmatprep.subr.mxu0 0.0
      %1239 = vmatpush1.msra.mxu0 0.0
      %1240 = vmatprep.subr.mxu0 0.0
      %1241 = vmatpush1.msra.mxu0 0.0
      %1242 = vmatprep.subr.mxu0 0.0
      %1243 = vmatpush1.msra.mxu0 0.0
      %1244 = vmatprep.subr.mxu0 0.0
      %1245 = vmatpush1.msra.mxu0 0.0
      %1246 = vmatprep.subr.mxu0 0.0
      %1247 = vmatpush1.msra.mxu0 0.0
      %1248 = vmatprep.subr.mxu0 0.0
      %1249 = vmatpush1.msra.mxu0 0.0
      %1250 = vmatprep.subr.mxu0 0.0
      %1251 = vmatpush1.msra.mxu0 0.0
      %1252 = vmatprep.subr.mxu0 0.0
      %1253 = vmatpush1.msra.mxu0 0.0
      %1254 = vmatprep.subr.mxu0 0.0
      %1255 = vmatpush1.msra.mxu0 0.0
      %1256 = vmatprep.subr.mxu0 0.0
      %1257 = vmatpush1.msra.mxu0 %v678
      %1258 = vmatprep.subr.mxu0 0.0
      %1259 = vmatpush1.msra.mxu0 %v677
      %1260 = vmatprep.subr.mxu0 0.0
      %1261 = vmatpush1.msra.mxu0 %v676
      %1262 = vmatprep.subr.mxu0 0.0
      %1263 = vmatpush1.msra.mxu0 %v675
      %1264 = vmatprep.subr.mxu0 0.0
      %1265 = vmatpush2.msra.mxu0 0.0
      %1266 = vmatprep.subr.mxu0 0.0
      %1267 = vmatpush2.msra.mxu0 0.0
      %1268 = vmatprep.subr.mxu0 0.0
      %1269 = vmatpush2.msra.mxu0 0.0
      %1270 = vmatprep.subr.mxu0 0.0
      %1271 = vmatpush2.msra.mxu0 0.0
      %1272 = vmatprep.subr.mxu0 0.0
      %1273 = vmatpush2.msra.mxu0 0.0
      %1274 = vmatprep.subr.mxu0 0.0
      %1275 = vmatpush2.msra.mxu0 0.0
      %1276 = vmatprep.subr.mxu0 0.0
      %1277 = vmatpush2.msra.mxu0 0.0
      %1278 = vmatprep.subr.mxu0 0.0
      %1279 = vmatpush2.msra.mxu0 0.0
      %1280 = vmatprep.subr.mxu0 0.0
      %1281 = vmatpush2.msra.mxu0 0.0
      %1282 = vmatprep.subr.mxu0 0.0
      %1283 = vmatpush2.msra.mxu0 0.0
      %1284 = vmatprep.subr.mxu0 0.0
      %1285 = vmatpush2.msra.mxu0 0.0
      %1286 = vmatprep.subr.mxu0 0.0
      %1287 = vmatpush2.msra.mxu0 0.0
      %1288 = vmatprep.subr.mxu0 0.0
      %1289 = vmatpush2.msra.mxu0 0.0
      %1290 = vmatprep.subr.mxu0 0.0
      %1291 = vmatpush2.msra.mxu0 0.0
      %1292 = vmatprep.subr.mxu0 0.0
      %1293 = vmatpush2.msra.mxu0 0.0
      %1294 = vmatprep.subr.mxu0 0.0
      %1295 = vmatpush2.msra.mxu0 0.0
      %1296 = vmatprep.mubr.f32.mxu0 0.0
      %1297 = vmatmul.mubr.f32.gmra.mxu0 %v1209
      %v1298 = vpop.f32.mrf.mxu0
      %v1299 = vadd.f32 0.0, %v1298
      %v1300 = vpop.f32.mrf.mxu0
      %1301 = vmatprep.mubr.f32.mxu0 0.0
      %1302 = vmatmul.mubr.f32.gmra.mxu0 %v1212
      %v1303 = vpop.f32.mrf.mxu0
      %v1304 = vadd.f32 0.0, %v1303
      %v1305 = vpop.f32.mrf.mxu0
      %1306 = vmatprep.mubr.f32.mxu0 0.0
      %1307 = vmatmul.mubr.f32.gmra.mxu0 %v1215
      %v1308 = vpop.f32.mrf.mxu0
      %v1309 = vadd.f32 0.0, %v1308
      %v1310 = vpop.f32.mrf.mxu0
      %1311 = vmatprep.mubr.f32.mxu0 0.0
      %1312 = vmatmul.mubr.f32.gmra.mxu0 %v1218
      %v1313 = vpop.f32.mrf.mxu0
      %v1314 = vadd.f32 0.0, %v1313
      %v1315 = vpop.f32.mrf.mxu0
      %1316 = vmatprep.mubr.f32.mxu0 0.0
      %1317 = vmatmul.mubr.f32.gmra.mxu0 %v1221
      %v1318 = vpop.f32.mrf.mxu0
      %v1319 = vadd.f32 0.0, %v1318
      %v1320 = vpop.f32.mrf.mxu0
      %1321 = vmatprep.mubr.f32.mxu0 0.0
      %1322 = vmatmul.mubr.f32.gmra.mxu0 %v1224
      %v1323 = vpop.f32.mrf.mxu0
      %v1324 = vadd.f32 0.0, %v1323
      %v1325 = vpop.f32.mrf.mxu0
      %1326 = vmatprep.mubr.f32.mxu0 0.0
      %1327 = vmatmul.mubr.f32.gmra.mxu0 %v1227
      %v1328 = vpop.f32.mrf.mxu0
      %v1329 = vadd.f32 0.0, %v1328
      %v1330 = vpop.f32.mrf.mxu0
      %1331 = vmatprep.mubr.f32.mxu0 0.0
      %1332 = vmatmul.mubr.f32.gmra.mxu0 %v1230
      %v1333 = vpop.f32.mrf.mxu0
      %v1334 = vadd.f32 0.0, %v1333
      %v1335 = vpop.f32.mrf.mxu0
      %1336 = vdwg.mxu0
      %v1337 = vlaneseq
      %v1338 = vshrl.u32 %v1337, 7
      %v1339 = vcombine.high %v704, %v704
      %v1341 = vunpack.c.l.s4 1966171168
      %v1342 = vunpack.c.0.s8 %v1341
      %v1343 = vlaneseq
      %v1344 = vshrl.u32 %v1343, 7
      %v1345 = vsub.s32 %v1342, %v1344
      %v1346 = vrot.slane %v704, %v1345
      %v1348 = vunpack.c.l.s4 1966171168
      %v1349 = vunpack.c.0.s8 %v1348
      %v1350 = vlaneseq
      %v1351 = vshrl.u32 %v1350, 7
      %v1352 = vsub.s32 %v1349, %v1351
      %v1353 = vrot.slane %v1339, %v1352
      %v1354 = vcombine.high %v1346, %v1346
      %v1355 = vcombine.high %v1353, %v1353
      %v1357 = vunpack.c.l.s4 1966171168
      %v1358 = vunpack.c.0.s8 %v1357
      %v1359 = vlaneseq
      %v1360 = vshrl.u32 %v1359, 7
      %v1361 = vsub.s32 %v1358, %v1360
      %v1362 = vrot.slane %v1346, %v1361
      %v1364 = vunpack.c.l.s4 1966171168
      %v1365 = vunpack.c.0.s8 %v1364
      %v1366 = vlaneseq
      %v1367 = vshrl.u32 %v1366, 7
      %v1368 = vsub.s32 %v1365, %v1367
      %v1369 = vrot.slane %v1353, %v1368
      %v1371 = vunpack.c.l.s4 1966171168
      %v1372 = vunpack.c.0.s8 %v1371
      %v1373 = vlaneseq
      %v1374 = vshrl.u32 %v1373, 7
      %v1375 = vsub.s32 %v1372, %v1374
      %v1376 = vrot.slane %v1354, %v1375
      %v1378 = vunpack.c.l.s4 1966171168
      %v1379 = vunpack.c.0.s8 %v1378
      %v1380 = vlaneseq
      %v1381 = vshrl.u32 %v1380, 7
      %v1382 = vsub.s32 %v1379, %v1381
      %v1383 = vrot.slane %v1355, %v1382
      %v1384 = vcombine.high %v1362, %v1362
      %v1385 = vcombine.high %v1369, %v1369
      %v1386 = vcombine.high %v1376, %v1376
      %v1387 = vcombine.high %v1383, %v1383
      %v1388 = vlaneseq
      %v1389 = vshrl.u32 %v1388, 7
      %v1390 = vsub.s32 0, %v1389
      %v1391 = vrot.slane %v1362, %v1390
      %v1392 = vlaneseq
      %v1393 = vshrl.u32 %v1392, 7
      %v1394 = vsub.s32 0, %v1393
      %v1395 = vrot.slane %v1376, %v1394
      %v1396 = vlaneseq
      %v1397 = vshrl.u32 %v1396, 7
      %v1398 = vsub.s32 0, %v1397
      %v1399 = vrot.slane %v1384, %v1398
      %v1400 = vlaneseq
      %v1401 = vshrl.u32 %v1400, 7
      %v1402 = vsub.s32 0, %v1401
      %v1403 = vrot.slane %v1386, %v1402
      %v1404 = vlaneseq
      %v1405 = vshrl.u32 %v1404, 7
      %v1406 = vsub.s32 0, %v1405
      %v1407 = vrot.slane %v1369, %v1406
      %v1408 = vlaneseq
      %v1409 = vshrl.u32 %v1408, 7
      %v1410 = vsub.s32 0, %v1409
      %v1411 = vrot.slane %v1383, %v1410
      %v1412 = vlaneseq
      %v1413 = vshrl.u32 %v1412, 7
      %v1414 = vsub.s32 0, %v1413
      %v1415 = vrot.slane %v1385, %v1414
      %v1416 = vlaneseq
      %v1417 = vshrl.u32 %v1416, 7
      %v1418 = vsub.s32 0, %v1417
      %v1419 = vrot.slane %v1387, %v1418
      %vm1420 = vcmp.lt.s32.totalorder %v1338, %v1391
      %vm1421 = vcmp.lt.s32.totalorder %v1338, %v1395
      %vm1422 = vcmp.lt.s32.totalorder %v1338, %v1399
      %vm1423 = vcmp.lt.s32.totalorder %v1338, %v1403
      %vm1424 = vcmp.lt.s32.totalorder %v1338, %v1407
      %vm1425 = vcmp.lt.s32.totalorder %v1338, %v1411
      %vm1426 = vcmp.lt.s32.totalorder %v1338, %v1415
      %vm1427 = vcmp.lt.s32.totalorder %v1338, %v1419
      %v1428 = vsel %vm1420, %v1299, -1e+09
      %v1429 = vsel %vm1421, %v1304, -1e+09
      %v1430 = vsel %vm1422, %v1309, -1e+09
      %v1431 = vsel %vm1423, %v1314, -1e+09
      %v1432 = vsel %vm1424, %v1319, -1e+09
      %v1433 = vsel %vm1425, %v1324, -1e+09
      %v1434 = vsel %vm1426, %v1329, -1e+09
      %v1435 = vsel %vm1427, %v1334, -1e+09
      %vm1436 = vcmask 7168
      %v1437 = vsel %vm1436, %v1428, -inf
      %v1438 = vrot.slane %v1437, 4
      %v1439 = vmax.f32 %v1437, %v1438
      %v1440 = vrot.slane %v1439, 2
      %v1441 = vmax.f32 %v1439, %v1440
      %v1442 = vrot.slane %v1441, 1
      %v1443 = vmax.f32 %v1441, %v1442
      %v1444 = vsel %vm1436, %v1429, -inf
      %v1445 = vrot.slane %v1444, 4
      %v1446 = vmax.f32 %v1444, %v1445
      %v1447 = vrot.slane %v1446, 2
      %v1448 = vmax.f32 %v1446, %v1447
      %v1449 = vrot.slane %v1448, 1
      %v1450 = vmax.f32 %v1448, %v1449
      %v1451 = vsel %vm1436, %v1430, -inf
      %v1452 = vrot.slane %v1451, 4
      %v1453 = vmax.f32 %v1451, %v1452
      %v1454 = vrot.slane %v1453, 2
      %v1455 = vmax.f32 %v1453, %v1454
      %v1456 = vrot.slane %v1455, 1
      %v1457 = vmax.f32 %v1455, %v1456
      %v1458 = vsel %vm1436, %v1431, -inf
      %v1459 = vrot.slane %v1458, 4
      %v1460 = vmax.f32 %v1458, %v1459
      %v1461 = vrot.slane %v1460, 2
      %v1462 = vmax.f32 %v1460, %v1461
      %v1463 = vrot.slane %v1462, 1
      %v1464 = vmax.f32 %v1462, %v1463
      %v1465 = vsel %vm1436, %v1432, -inf
      %v1466 = vrot.slane %v1465, 4
      %v1467 = vmax.f32 %v1465, %v1466
      %v1468 = vrot.slane %v1467, 2
      %v1469 = vmax.f32 %v1467, %v1468
      %v1470 = vrot.slane %v1469, 1
      %v1471 = vmax.f32 %v1469, %v1470
      %v1472 = vsel %vm1436, %v1433, -inf
      %v1473 = vrot.slane %v1472, 4
      %v1474 = vmax.f32 %v1472, %v1473
      %v1475 = vrot.slane %v1474, 2
      %v1476 = vmax.f32 %v1474, %v1475
      %v1477 = vrot.slane %v1476, 1
      %v1478 = vmax.f32 %v1476, %v1477
      %v1479 = vsel %vm1436, %v1434, -inf
      %v1480 = vrot.slane %v1479, 4
      %v1481 = vmax.f32 %v1479, %v1480
      %v1482 = vrot.slane %v1481, 2
      %v1483 = vmax.f32 %v1481, %v1482
      %v1484 = vrot.slane %v1483, 1
      %v1485 = vmax.f32 %v1483, %v1484
      %v1486 = vsel %vm1436, %v1435, -inf
      %v1487 = vrot.slane %v1486, 4
      %v1488 = vmax.f32 %v1486, %v1487
      %v1489 = vrot.slane %v1488, 2
      %v1490 = vmax.f32 %v1488, %v1489
      %v1491 = vrot.slane %v1490, 1
      %v1492 = vmax.f32 %v1490, %v1491
      %v1493 = vsub.f32 %v1428, %v1443
      %v1494 = vsub.f32 %v1429, %v1450
      %v1495 = vsub.f32 %v1430, %v1457
      %v1496 = vsub.f32 %v1431, %v1464
      %v1497 = vsub.f32 %v1432, %v1471
      %v1498 = vsub.f32 %v1433, %v1478
      %v1499 = vsub.f32 %v1434, %v1485
      %v1500 = vsub.f32 %v1435, %v1492
      %v1501 = vmul.f32 %v1493, 1.442695
      %v1502 = vpow.pop %v1501
      %v1503 = vmul.f32 %v1494, 1.442695
      %v1504 = vpow.pop %v1503
      %v1505 = vmul.f32 %v1495, 1.442695
      %v1506 = vpow.pop %v1505
      %v1507 = vmul.f32 %v1496, 1.442695
      %v1508 = vpow.pop %v1507
      %v1509 = vmul.f32 %v1497, 1.442695
      %v1510 = vpow.pop %v1509
      %v1511 = vmul.f32 %v1498, 1.442695
      %v1512 = vpow.pop %v1511
      %v1513 = vmul.f32 %v1499, 1.442695
      %v1514 = vpow.pop %v1513
      %v1515 = vmul.f32 %v1500, 1.442695
      %v1516 = vpow.pop %v1515
      %v1517 = vsel %vm1436, %v1502, 0.0
      %v1518 = vrot.slane %v1517, 4
      %v1519 = vadd.f32 %v1517, %v1518
      %v1520 = vrot.slane %v1519, 2
      %v1521 = vadd.f32 %v1519, %v1520
      %v1522 = vrot.slane %v1521, 1
      %v1523 = vadd.f32 %v1521, %v1522
      %v1524 = vsel %vm1436, %v1504, 0.0
      %v1525 = vrot.slane %v1524, 4
      %v1526 = vadd.f32 %v1524, %v1525
      %v1527 = vrot.slane %v1526, 2
      %v1528 = vadd.f32 %v1526, %v1527
      %v1529 = vrot.slane %v1528, 1
      %v1530 = vadd.f32 %v1528, %v1529
      %v1531 = vsel %vm1436, %v1506, 0.0
      %v1532 = vrot.slane %v1531, 4
      %v1533 = vadd.f32 %v1531, %v1532
      %v1534 = vrot.slane %v1533, 2
      %v1535 = vadd.f32 %v1533, %v1534
      %v1536 = vrot.slane %v1535, 1
      %v1537 = vadd.f32 %v1535, %v1536
      %v1538 = vsel %vm1436, %v1508, 0.0
      %v1539 = vrot.slane %v1538, 4
      %v1540 = vadd.f32 %v1538, %v1539
      %v1541 = vrot.slane %v1540, 2
      %v1542 = vadd.f32 %v1540, %v1541
      %v1543 = vrot.slane %v1542, 1
      %v1544 = vadd.f32 %v1542, %v1543
      %v1545 = vsel %vm1436, %v1510, 0.0
      %v1546 = vrot.slane %v1545, 4
      %v1547 = vadd.f32 %v1545, %v1546
      %v1548 = vrot.slane %v1547, 2
      %v1549 = vadd.f32 %v1547, %v1548
      %v1550 = vrot.slane %v1549, 1
      %v1551 = vadd.f32 %v1549, %v1550
      %v1552 = vsel %vm1436, %v1512, 0.0
      %v1553 = vrot.slane %v1552, 4
      %v1554 = vadd.f32 %v1552, %v1553
      %v1555 = vrot.slane %v1554, 2
      %v1556 = vadd.f32 %v1554, %v1555
      %v1557 = vrot.slane %v1556, 1
      %v1558 = vadd.f32 %v1556, %v1557
      %v1559 = vsel %vm1436, %v1514, 0.0
      %v1560 = vrot.slane %v1559, 4
      %v1561 = vadd.f32 %v1559, %v1560
      %v1562 = vrot.slane %v1561, 2
      %v1563 = vadd.f32 %v1561, %v1562
      %v1564 = vrot.slane %v1563, 1
      %v1565 = vadd.f32 %v1563, %v1564
      %v1566 = vsel %vm1436, %v1516, 0.0
      %v1567 = vrot.slane %v1566, 4
      %v1568 = vadd.f32 %v1566, %v1567
      %v1569 = vrot.slane %v1568, 2
      %v1570 = vadd.f32 %v1568, %v1569
      %v1571 = vrot.slane %v1570, 1
      %v1572 = vadd.f32 %v1570, %v1571
      %v1573 = vrcp.pop %v1523
      %v1574 = vmul.f32 1.0, %v1573
      %v1575 = vrcp.pop %v1530
      %v1576 = vmul.f32 1.0, %v1575
      %v1577 = vrcp.pop %v1537
      %v1578 = vmul.f32 1.0, %v1577
      %v1579 = vrcp.pop %v1544
      %v1580 = vmul.f32 1.0, %v1579
      %v1581 = vrcp.pop %v1551
      %v1582 = vmul.f32 1.0, %v1581
      %v1583 = vrcp.pop %v1558
      %v1584 = vmul.f32 1.0, %v1583
      %v1585 = vrcp.pop %v1565
      %v1586 = vmul.f32 1.0, %v1585
      %v1587 = vrcp.pop %v1572
      %v1588 = vmul.f32 1.0, %v1587
      %v1589 = vmul.f32 %v1502, %v1574
      %v1590 = vmul.f32 %v1504, %v1576
      %v1591 = vmul.f32 %v1506, %v1578
      %v1592 = vmul.f32 %v1508, %v1580
      %v1593 = vmul.f32 %v1510, %v1582
      %v1594 = vmul.f32 %v1512, %v1584
      %v1595 = vmul.f32 %v1514, %v1586
      %v1596 = vmul.f32 %v1516, %v1588
      %v1597 = vcvt.s32.f32 %v1362
      %v1598 = vcvt.s32.f32 %v1376
      %v1599 = vcvt.s32.f32 %v1384
      %v1600 = vcvt.s32.f32 %v1386
      %v1601 = vcvt.s32.f32 %v1369
      %v1602 = vcvt.s32.f32 %v1383
      %v1603 = vcvt.s32.f32 %v1385
      %v1604 = vcvt.s32.f32 %v1387
      %v1605 = vmax.f32 %v1597, 1.0
      %v1606 = vmax.f32 %v1598, 1.0
      %v1607 = vmax.f32 %v1599, 1.0
      %v1608 = vmax.f32 %v1600, 1.0
      %v1609 = vmax.f32 %v1601, 1.0
      %v1610 = vmax.f32 %v1602, 1.0
      %v1611 = vmax.f32 %v1603, 1.0
      %v1612 = vmax.f32 %v1604, 1.0
      %v1613 = vsel %vm1420, 1, 0
      %v1614 = vsel %vm1421, 1, 0
      %v1615 = vsel %vm1422, 1, 0
      %v1616 = vsel %vm1423, 1, 0
      %v1617 = vsel %vm1424, 1, 0
      %v1618 = vsel %vm1425, 1, 0
      %v1619 = vsel %vm1426, 1, 0
      %v1620 = vsel %vm1427, 1, 0
      %v1621 = vcvt.s32.f32 %v1613
      %v1622 = vcvt.s32.f32 %v1614
      %v1623 = vcvt.s32.f32 %v1615
      %v1624 = vcvt.s32.f32 %v1616
      %v1625 = vcvt.s32.f32 %v1617
      %v1626 = vcvt.s32.f32 %v1618
      %v1627 = vcvt.s32.f32 %v1619
      %v1628 = vcvt.s32.f32 %v1620
      %v1629 = vrcp.pop %v1605
      %v1630 = vmul.f32 1.0, %v1629
      %v1631 = vrcp.pop %v1606
      %v1632 = vmul.f32 1.0, %v1631
      %v1633 = vrcp.pop %v1607
      %v1634 = vmul.f32 1.0, %v1633
      %v1635 = vrcp.pop %v1608
      %v1636 = vmul.f32 1.0, %v1635
      %v1637 = vrcp.pop %v1609
      %v1638 = vmul.f32 1.0, %v1637
      %v1639 = vrcp.pop %v1610
      %v1640 = vmul.f32 1.0, %v1639
      %v1641 = vrcp.pop %v1611
      %v1642 = vmul.f32 1.0, %v1641
      %v1643 = vrcp.pop %v1612
      %v1644 = vmul.f32 1.0, %v1643
      %v1653 = vlaneseq
      %v1654 = vshrl.u32 %v1653, 7
      %v1655 = vsub.s32 0, %v1654
      %v1656 = vrot.slane %v1630, %v1655
      %v1657 = vlaneseq
      %v1658 = vshrl.u32 %v1657, 7
      %v1659 = vsub.s32 0, %v1658
      %v1660 = vrot.slane %v1632, %v1659
      %v1661 = vlaneseq
      %v1662 = vshrl.u32 %v1661, 7
      %v1663 = vsub.s32 0, %v1662
      %v1664 = vrot.slane %v1634, %v1663
      %v1665 = vlaneseq
      %v1666 = vshrl.u32 %v1665, 7
      %v1667 = vsub.s32 0, %v1666
      %v1668 = vrot.slane %v1636, %v1667
      %v1669 = vlaneseq
      %v1670 = vshrl.u32 %v1669, 7
      %v1671 = vsub.s32 0, %v1670
      %v1672 = vrot.slane %v1638, %v1671
      %v1673 = vlaneseq
      %v1674 = vshrl.u32 %v1673, 7
      %v1675 = vsub.s32 0, %v1674
      %v1676 = vrot.slane %v1640, %v1675
      %v1677 = vlaneseq
      %v1678 = vshrl.u32 %v1677, 7
      %v1679 = vsub.s32 0, %v1678
      %v1680 = vrot.slane %v1642, %v1679
      %v1681 = vlaneseq
      %v1682 = vshrl.u32 %v1681, 7
      %v1683 = vsub.s32 0, %v1682
      %v1684 = vrot.slane %v1644, %v1683
      %v1693 = vmul.f32 %v1621, %v1656
      %v1694 = vmul.f32 %v1622, %v1660
      %v1695 = vmul.f32 %v1623, %v1664
      %v1696 = vmul.f32 %v1624, %v1668
      %v1697 = vmul.f32 %v1625, %v1672
      %v1698 = vmul.f32 %v1626, %v1676
      %v1699 = vmul.f32 %v1627, %v1680
      %v1700 = vmul.f32 %v1628, %v1684
      %1702 = vset.pattern.permute.xlu0 0
      %1703 = vperm.xlu0 %1702, %v1589
      %v1704 = vpop.permute.xlu0 %1703
      %1707 = vset.pattern.permute.xlu0 0
      %1708 = vperm.xlu0 %1707, %v1590
      %v1709 = vpop.permute.xlu0 %1708
      %1712 = vset.pattern.permute.xlu0 0
      %1713 = vperm.xlu0 %1712, %v1591
      %v1714 = vpop.permute.xlu0 %1713
      %1717 = vset.pattern.permute.xlu0 0
      %1718 = vperm.xlu0 %1717, %v1592
      %v1719 = vpop.permute.xlu0 %1718
      %1722 = vset.pattern.permute.xlu0 0
      %1723 = vperm.xlu0 %1722, %v1593
      %v1724 = vpop.permute.xlu0 %1723
      %1727 = vset.pattern.permute.xlu0 0
      %1728 = vperm.xlu0 %1727, %v1594
      %v1729 = vpop.permute.xlu0 %1728
      %1732 = vset.pattern.permute.xlu0 0
      %1733 = vperm.xlu0 %1732, %v1595
      %v1734 = vpop.permute.xlu0 %1733
      %1737 = vset.pattern.permute.xlu0 0
      %1738 = vperm.xlu0 %1737, %v1596
      %v1739 = vpop.permute.xlu0 %1738
      %v1741 = vmul.f32 %v1704, %v952
      %v1742 = vmul.f32 %v1709, %v957
      %v1743 = vmul.f32 %v1714, %v962
      %v1744 = vmul.f32 %v1719, %v967
      %v1745 = vmul.f32 %v1724, %v972
      %v1746 = vmul.f32 %v1729, %v977
      %v1747 = vmul.f32 %v1734, %v982
      %v1748 = vmul.f32 %v1739, %v987
      %v1749 = vsel %vm1207, %v1741, 0.0
      %v1750 = vrot.slane %v1749, 4
      %v1751 = vadd.f32 %v1749, %v1750
      %v1752 = vrot.slane %v1751, 2
      %v1753 = vadd.f32 %v1751, %v1752
      %v1754 = vrot.slane %v1753, 1
      %v1755 = vadd.f32 %v1753, %v1754
      %v1756 = vsel %vm1207, %v1742, 0.0
      %v1757 = vrot.slane %v1756, 4
      %v1758 = vadd.f32 %v1756, %v1757
      %v1759 = vrot.slane %v1758, 2
      %v1760 = vadd.f32 %v1758, %v1759
      %v1761 = vrot.slane %v1760, 1
      %v1762 = vadd.f32 %v1760, %v1761
      %v1763 = vsel %vm1207, %v1743, 0.0
      %v1764 = vrot.slane %v1763, 4
      %v1765 = vadd.f32 %v1763, %v1764
      %v1766 = vrot.slane %v1765, 2
      %v1767 = vadd.f32 %v1765, %v1766
      %v1768 = vrot.slane %v1767, 1
      %v1769 = vadd.f32 %v1767, %v1768
      %v1770 = vsel %vm1207, %v1744, 0.0
      %v1771 = vrot.slane %v1770, 4
      %v1772 = vadd.f32 %v1770, %v1771
      %v1773 = vrot.slane %v1772, 2
      %v1774 = vadd.f32 %v1772, %v1773
      %v1775 = vrot.slane %v1774, 1
      %v1776 = vadd.f32 %v1774, %v1775
      %v1777 = vsel %vm1207, %v1745, 0.0
      %v1778 = vrot.slane %v1777, 4
      %v1779 = vadd.f32 %v1777, %v1778
      %v1780 = vrot.slane %v1779, 2
      %v1781 = vadd.f32 %v1779, %v1780
      %v1782 = vrot.slane %v1781, 1
      %v1783 = vadd.f32 %v1781, %v1782
      %v1784 = vsel %vm1207, %v1746, 0.0
      %v1785 = vrot.slane %v1784, 4
      %v1786 = vadd.f32 %v1784, %v1785
      %v1787 = vrot.slane %v1786, 2
      %v1788 = vadd.f32 %v1786, %v1787
      %v1789 = vrot.slane %v1788, 1
      %v1790 = vadd.f32 %v1788, %v1789
      %v1791 = vsel %vm1207, %v1747, 0.0
      %v1792 = vrot.slane %v1791, 4
      %v1793 = vadd.f32 %v1791, %v1792
      %v1794 = vrot.slane %v1793, 2
      %v1795 = vadd.f32 %v1793, %v1794
      %v1796 = vrot.slane %v1795, 1
      %v1797 = vadd.f32 %v1795, %v1796
      %v1798 = vsel %vm1207, %v1748, 0.0
      %v1799 = vrot.slane %v1798, 4
      %v1800 = vadd.f32 %v1798, %v1799
      %v1801 = vrot.slane %v1800, 2
      %v1802 = vadd.f32 %v1800, %v1801
      %v1803 = vrot.slane %v1802, 1
      %v1804 = vadd.f32 %v1802, %v1803
      %1806 = vset.pattern.permute.xlu0 0
      %1807 = vperm.xlu0 %1806, %v1693
      %v1808 = vpop.permute.xlu0 %1807
      %1811 = vset.pattern.permute.xlu0 0
      %1812 = vperm.xlu0 %1811, %v1694
      %v1813 = vpop.permute.xlu0 %1812
      %1816 = vset.pattern.permute.xlu0 0
      %1817 = vperm.xlu0 %1816, %v1695
      %v1818 = vpop.permute.xlu0 %1817
      %1821 = vset.pattern.permute.xlu0 0
      %1822 = vperm.xlu0 %1821, %v1696
      %v1823 = vpop.permute.xlu0 %1822
      %1826 = vset.pattern.permute.xlu0 0
      %1827 = vperm.xlu0 %1826, %v1697
      %v1828 = vpop.permute.xlu0 %1827
      %1831 = vset.pattern.permute.xlu0 0
      %1832 = vperm.xlu0 %1831, %v1698
      %v1833 = vpop.permute.xlu0 %1832
      %1836 = vset.pattern.permute.xlu0 0
      %1837 = vperm.xlu0 %1836, %v1699
      %v1838 = vpop.permute.xlu0 %1837
      %1841 = vset.pattern.permute.xlu0 0
      %1842 = vperm.xlu0 %1841, %v1700
      %v1843 = vpop.permute.xlu0 %1842
      %v1845 = vmul.f32 %v1808, %v952
      %v1846 = vmul.f32 %v1813, %v957
      %v1847 = vmul.f32 %v1818, %v962
      %v1848 = vmul.f32 %v1823, %v967
      %v1849 = vmul.f32 %v1828, %v972
      %v1850 = vmul.f32 %v1833, %v977
      %v1851 = vmul.f32 %v1838, %v982
      %v1852 = vmul.f32 %v1843, %v987
      %v1853 = vsel %vm1207, %v1845, 0.0
      %v1854 = vrot.slane %v1853, 4
      %v1855 = vadd.f32 %v1853, %v1854
      %v1856 = vrot.slane %v1855, 2
      %v1857 = vadd.f32 %v1855, %v1856
      %v1858 = vrot.slane %v1857, 1
      %v1859 = vadd.f32 %v1857, %v1858
      %v1860 = vsel %vm1207, %v1846, 0.0
      %v1861 = vrot.slane %v1860, 4
      %v1862 = vadd.f32 %v1860, %v1861
      %v1863 = vrot.slane %v1862, 2
      %v1864 = vadd.f32 %v1862, %v1863
      %v1865 = vrot.slane %v1864, 1
      %v1866 = vadd.f32 %v1864, %v1865
      %v1867 = vsel %vm1207, %v1847, 0.0
      %v1868 = vrot.slane %v1867, 4
      %v1869 = vadd.f32 %v1867, %v1868
      %v1870 = vrot.slane %v1869, 2
      %v1871 = vadd.f32 %v1869, %v1870
      %v1872 = vrot.slane %v1871, 1
      %v1873 = vadd.f32 %v1871, %v1872
      %v1874 = vsel %vm1207, %v1848, 0.0
      %v1875 = vrot.slane %v1874, 4
      %v1876 = vadd.f32 %v1874, %v1875
      %v1877 = vrot.slane %v1876, 2
      %v1878 = vadd.f32 %v1876, %v1877
      %v1879 = vrot.slane %v1878, 1
      %v1880 = vadd.f32 %v1878, %v1879
      %v1881 = vsel %vm1207, %v1849, 0.0
      %v1882 = vrot.slane %v1881, 4
      %v1883 = vadd.f32 %v1881, %v1882
      %v1884 = vrot.slane %v1883, 2
      %v1885 = vadd.f32 %v1883, %v1884
      %v1886 = vrot.slane %v1885, 1
      %v1887 = vadd.f32 %v1885, %v1886
      %v1888 = vsel %vm1207, %v1850, 0.0
      %v1889 = vrot.slane %v1888, 4
      %v1890 = vadd.f32 %v1888, %v1889
      %v1891 = vrot.slane %v1890, 2
      %v1892 = vadd.f32 %v1890, %v1891
      %v1893 = vrot.slane %v1892, 1
      %v1894 = vadd.f32 %v1892, %v1893
      %v1895 = vsel %vm1207, %v1851, 0.0
      %v1896 = vrot.slane %v1895, 4
      %v1897 = vadd.f32 %v1895, %v1896
      %v1898 = vrot.slane %v1897, 2
      %v1899 = vadd.f32 %v1897, %v1898
      %v1900 = vrot.slane %v1899, 1
      %v1901 = vadd.f32 %v1899, %v1900
      %v1902 = vsel %vm1207, %v1852, 0.0
      %v1903 = vrot.slane %v1902, 4
      %v1904 = vadd.f32 %v1902, %v1903
      %v1905 = vrot.slane %v1904, 2
      %v1906 = vadd.f32 %v1904, %v1905
      %v1907 = vrot.slane %v1906, 1
      %v1908 = vadd.f32 %v1906, %v1907
      %v1910 = vsel %vm1207, %v782, 0
      %1912 = vmatprep.subr.mxu0 0.0
      %1913 = vmatpush1.msra.mxu0 0.0
      %1914 = vmatprep.subr.mxu0 0.0
      %1915 = vmatpush1.msra.mxu0 0.0
      %1916 = vmatprep.subr.mxu0 0.0
      %1917 = vmatpush1.msra.mxu0 0.0
      %1918 = vmatprep.subr.mxu0 0.0
      %1919 = vmatpush1.msra.mxu0 0.0
      %1920 = vmatprep.subr.mxu0 0.0
      %1921 = vmatpush1.msra.mxu0 0.0
      %1922 = vmatprep.subr.mxu0 0.0
      %1923 = vmatpush1.msra.mxu0 0.0
      %1924 = vmatprep.subr.mxu0 0.0
      %1925 = vmatpush1.msra.mxu0 0.0
      %1926 = vmatprep.subr.mxu0 0.0
      %1927 = vmatpush1.msra.mxu0 0.0
      %1928 = vmatprep.subr.mxu0 0.0
      %1929 = vmatpush1.msra.mxu0 0.0
      %1930 = vmatprep.subr.mxu0 0.0
      %1931 = vmatpush1.msra.mxu0 0.0
      %1932 = vmatprep.subr.mxu0 0.0
      %1933 = vmatpush1.msra.mxu0 0.0
      %1934 = vmatprep.subr.mxu0 0.0
      %1935 = vmatpush1.msra.mxu0 0.0
      %1936 = vmatprep.subr.mxu0 0.0
      %1937 = vmatpush1.msra.mxu0 %v686
      %1938 = vmatprep.subr.mxu0 0.0
      %1939 = vmatpush1.msra.mxu0 %v685
      %1940 = vmatprep.subr.mxu0 0.0
      %1941 = vmatpush1.msra.mxu0 %v684
      %1942 = vmatprep.subr.mxu0 0.0
      %1943 = vmatpush1.msra.mxu0 %v683
      %1944 = vmatprep.subr.mxu0 0.0
      %1945 = vmatpush2.msra.mxu0 0.0
      %1946 = vmatprep.subr.mxu0 0.0
      %1947 = vmatpush2.msra.mxu0 0.0
      %1948 = vmatprep.subr.mxu0 0.0
      %1949 = vmatpush2.msra.mxu0 0.0
      %1950 = vmatprep.subr.mxu0 0.0
      %1951 = vmatpush2.msra.mxu0 0.0
      %1952 = vmatprep.subr.mxu0 0.0
      %1953 = vmatpush2.msra.mxu0 0.0
      %1954 = vmatprep.subr.mxu0 0.0
      %1955 = vmatpush2.msra.mxu0 0.0
      %1956 = vmatprep.subr.mxu0 0.0
      %1957 = vmatpush2.msra.mxu0 0.0
      %1958 = vmatprep.subr.mxu0 0.0
      %1959 = vmatpush2.msra.mxu0 0.0
      %1960 = vmatprep.subr.mxu0 0.0
      %1961 = vmatpush2.msra.mxu0 0.0
      %1962 = vmatprep.subr.mxu0 0.0
      %1963 = vmatpush2.msra.mxu0 0.0
      %1964 = vmatprep.subr.mxu0 0.0
      %1965 = vmatpush2.msra.mxu0 0.0
      %1966 = vmatprep.subr.mxu0 0.0
      %1967 = vmatpush2.msra.mxu0 0.0
      %1968 = vmatprep.subr.mxu0 0.0
      %1969 = vmatpush2.msra.mxu0 0.0
      %1970 = vmatprep.subr.mxu0 0.0
      %1971 = vmatpush2.msra.mxu0 0.0
      %1972 = vmatprep.subr.mxu0 0.0
      %1973 = vmatpush2.msra.mxu0 0.0
      %1974 = vmatprep.subr.mxu0 0.0
      %1975 = vmatpush2.msra.mxu0 0.0
      %1976 = vmatprep.mubr.f32.mxu0 0.0
      %1977 = vmatmul.mubr.f32.gmra.mxu0 %v1910
      %v1978 = vpop.f32.mrf.mxu0
      %v1979 = vadd.f32 0.0, %v1978
      %v1980 = vpop.f32.mrf.mxu0
      %1981 = vdwg.mxu0
      %vm1990 = vcmask 1041409
      %v1991 = vsel %vm1990, %v1762, %v1755
      %vm1992 = vcmask 1042434
      %v1993 = vsel %vm1992, %v1769, %v1991
      %vm1994 = vcmask 1043459
      %v1995 = vsel %vm1994, %v1776, %v1993
      %vm1996 = vcmask 1044484
      %v1997 = vsel %vm1996, %v1783, %v1995
      %vm1998 = vcmask 1045509
      %v1999 = vsel %vm1998, %v1790, %v1997
      %vm2000 = vcmask 1046534
      %v2001 = vsel %vm2000, %v1797, %v1999
      %vm2002 = vcmask 1047559
      %v2003 = vsel %vm2002, %v1804, %v2001
      %v2004 = vsel %vm1207, %v2003, 0
      %2006 = vmatprep.subr.mxu0 0.0
      %2007 = vmatpush1.msra.mxu0 0.0
      %2008 = vmatprep.subr.mxu0 0.0
      %2009 = vmatpush1.msra.mxu0 0.0
      %2010 = vmatprep.subr.mxu0 0.0
      %2011 = vmatpush1.msra.mxu0 0.0
      %2012 = vmatprep.subr.mxu0 0.0
      %2013 = vmatpush1.msra.mxu0 0.0
      %2014 = vmatprep.subr.mxu0 0.0
      %2015 = vmatpush1.msra.mxu0 0.0
      %2016 = vmatprep.subr.mxu0 0.0
      %2017 = vmatpush1.msra.mxu0 0.0
      %2018 = vmatprep.subr.mxu0 0.0
      %2019 = vmatpush1.msra.mxu0 0.0
      %2020 = vmatprep.subr.mxu0 0.0
      %2021 = vmatpush1.msra.mxu0 0.0
      %2022 = vmatprep.subr.mxu0 0.0
      %2023 = vmatpush1.msra.mxu0 0.0
      %2024 = vmatprep.subr.mxu0 0.0
      %2025 = vmatpush1.msra.mxu0 0.0
      %2026 = vmatprep.subr.mxu0 0.0
      %2027 = vmatpush1.msra.mxu0 0.0
      %2028 = vmatprep.subr.mxu0 0.0
      %2029 = vmatpush1.msra.mxu0 0.0
      %2030 = vmatprep.subr.mxu0 0.0
      %2031 = vmatpush1.msra.mxu0 %v682
      %2032 = vmatprep.subr.mxu0 0.0
      %2033 = vmatpush1.msra.mxu0 %v681
      %2034 = vmatprep.subr.mxu0 0.0
      %2035 = vmatpush1.msra.mxu0 %v680
      %2036 = vmatprep.subr.mxu0 0.0
      %2037 = vmatpush1.msra.mxu0 %v679
      %2038 = vmatprep.subr.mxu0 0.0
      %2039 = vmatpush2.msra.mxu0 0.0
      %2040 = vmatprep.subr.mxu0 0.0
      %2041 = vmatpush2.msra.mxu0 0.0
      %2042 = vmatprep.subr.mxu0 0.0
      %2043 = vmatpush2.msra.mxu0 0.0
      %2044 = vmatprep.subr.mxu0 0.0
      %2045 = vmatpush2.msra.mxu0 0.0
      %2046 = vmatprep.subr.mxu0 0.0
      %2047 = vmatpush2.msra.mxu0 0.0
      %2048 = vmatprep.subr.mxu0 0.0
      %2049 = vmatpush2.msra.mxu0 0.0
      %2050 = vmatprep.subr.mxu0 0.0
      %2051 = vmatpush2.msra.mxu0 0.0
      %2052 = vmatprep.subr.mxu0 0.0
      %2053 = vmatpush2.msra.mxu0 0.0
      %2054 = vmatprep.subr.mxu0 0.0
      %2055 = vmatpush2.msra.mxu0 0.0
      %2056 = vmatprep.subr.mxu0 0.0
      %2057 = vmatpush2.msra.mxu0 0.0
      %2058 = vmatprep.subr.mxu0 0.0
      %2059 = vmatpush2.msra.mxu0 0.0
      %2060 = vmatprep.subr.mxu0 0.0
      %2061 = vmatpush2.msra.mxu0 0.0
      %2062 = vmatprep.subr.mxu0 0.0
      %2063 = vmatpush2.msra.mxu0 0.0
      %2064 = vmatprep.subr.mxu0 0.0
      %2065 = vmatpush2.msra.mxu0 0.0
      %2066 = vmatprep.subr.mxu0 0.0
      %2067 = vmatpush2.msra.mxu0 0.0
      %2068 = vmatprep.subr.mxu0 0.0
      %2069 = vmatpush2.msra.mxu0 0.0
      %2070 = vmatprep.mubr.f32.mxu0 0.0
      %2071 = vmatmul.mubr.f32.gmra.mxu0 %v2004
      %v2072 = vpop.f32.mrf.mxu0
      %v2073 = vadd.f32 %v1979, %v2072
      %v2074 = vpop.f32.mrf.mxu0
      %2075 = vdwg.mxu0
      %v2084 = vsel %vm1990, %v1866, %v1859
      %v2085 = vsel %vm1992, %v1873, %v2084
      %v2086 = vsel %vm1994, %v1880, %v2085
      %v2087 = vsel %vm1996, %v1887, %v2086
      %v2088 = vsel %vm1998, %v1894, %v2087
      %v2089 = vsel %vm2000, %v1901, %v2088
      %v2090 = vsel %vm2002, %v1908, %v2089
      %v2091 = vsel %vm1207, %v2090, 0
      %2093 = vmatprep.subr.mxu0 0.0
      %2094 = vmatpush1.msra.mxu0 0.0
      %2095 = vmatprep.subr.mxu0 0.0
      %2096 = vmatpush1.msra.mxu0 0.0
      %2097 = vmatprep.subr.mxu0 0.0
      %2098 = vmatpush1.msra.mxu0 0.0
      %2099 = vmatprep.subr.mxu0 0.0
      %2100 = vmatpush1.msra.mxu0 0.0
      %2101 = vmatprep.subr.mxu0 0.0
      %2102 = vmatpush1.msra.mxu0 0.0
      %2103 = vmatprep.subr.mxu0 0.0
      %2104 = vmatpush1.msra.mxu0 0.0
      %2105 = vmatprep.subr.mxu0 0.0
      %2106 = vmatpush1.msra.mxu0 0.0
      %2107 = vmatprep.subr.mxu0 0.0
      %2108 = vmatpush1.msra.mxu0 0.0
      %2109 = vmatprep.subr.mxu0 0.0
      %2110 = vmatpush1.msra.mxu0 0.0
      %2111 = vmatprep.subr.mxu0 0.0
      %2112 = vmatpush1.msra.mxu0 0.0
      %2113 = vmatprep.subr.mxu0 0.0
      %2114 = vmatpush1.msra.mxu0 0.0
      %2115 = vmatprep.subr.mxu0 0.0
      %2116 = vmatpush1.msra.mxu0 0.0
      %2117 = vmatprep.subr.mxu0 0.0
      %2118 = vmatpush1.msra.mxu0 %v690
      %2119 = vmatprep.subr.mxu0 0.0
      %2120 = vmatpush1.msra.mxu0 %v689
      %2121 = vmatprep.subr.mxu0 0.0
      %2122 = vmatpush1.msra.mxu0 %v688
      %2123 = vmatprep.subr.mxu0 0.0
      %2124 = vmatpush1.msra.mxu0 %v687
      %2125 = vmatprep.subr.mxu0 0.0
      %2126 = vmatpush2.msra.mxu0 0.0
      %2127 = vmatprep.subr.mxu0 0.0
      %2128 = vmatpush2.msra.mxu0 0.0
      %2129 = vmatprep.subr.mxu0 0.0
      %2130 = vmatpush2.msra.mxu0 0.0
      %2131 = vmatprep.subr.mxu0 0.0
      %2132 = vmatpush2.msra.mxu0 0.0
      %2133 = vmatprep.subr.mxu0 0.0
      %2134 = vmatpush2.msra.mxu0 0.0
      %2135 = vmatprep.subr.mxu0 0.0
      %2136 = vmatpush2.msra.mxu0 0.0
      %2137 = vmatprep.subr.mxu0 0.0
      %2138 = vmatpush2.msra.mxu0 0.0
      %2139 = vmatprep.subr.mxu0 0.0
      %2140 = vmatpush2.msra.mxu0 0.0
      %2141 = vmatprep.subr.mxu0 0.0
      %2142 = vmatpush2.msra.mxu0 0.0
      %2143 = vmatprep.subr.mxu0 0.0
      %2144 = vmatpush2.msra.mxu0 0.0
      %2145 = vmatprep.subr.mxu0 0.0
      %2146 = vmatpush2.msra.mxu0 0.0
      %2147 = vmatprep.subr.mxu0 0.0
      %2148 = vmatpush2.msra.mxu0 0.0
      %2149 = vmatprep.subr.mxu0 0.0
      %2150 = vmatpush2.msra.mxu0 0.0
      %2151 = vmatprep.subr.mxu0 0.0
      %2152 = vmatpush2.msra.mxu0 0.0
      %2153 = vmatprep.subr.mxu0 0.0
      %2154 = vmatpush2.msra.mxu0 0.0
      %2155 = vmatprep.subr.mxu0 0.0
      %2156 = vmatpush2.msra.mxu0 0.0
      %2157 = vmatprep.mubr.f32.mxu0 0.0
      %2158 = vmatmul.mubr.f32.gmra.mxu0 %v2091
      %v2159 = vpop.f32.mrf.mxu0
      %v2160 = vadd.f32 0.0, %v2159
      %v2161 = vpop.f32.mrf.mxu0
      %2162 = vdwg.mxu0
      %v2163 = vadd.f32 %v2073, %v2160
      %v2165 = vlaneseq
      %v2166 = vshrl.u32 %v2165, 7
      %v2167 = vsub.s32 0, %v2166
      %v2168 = vrot.slane %v691, %v2167
      %v2170 = vadd.f32 %v2163, %v2168
      %v2171 = vmax.f32 %v2170, 0.0
      %v2172 = vld [vmem:[%s14] sm:$0xff]
      %v2173 = vld [vmem:[%s14 + $0x8] sm:$0xff]
      %v2174 = vld [vmem:[%s14 + $0x10] sm:$0xff]
      %v2175 = vld [vmem:[%s14 + $0x18] sm:$0xff]
      %v2176 = vld [vmem:[%s14 + $0x20] sm:$0xff]
      %v2177 = vld [vmem:[%s14 + $0x28] sm:$0xff]
      %v2178 = vld [vmem:[%s14 + $0x30] sm:$0xff]
      %v2179 = vld [vmem:[%s14 + $0x38] sm:$0xff]
      %v2180 = vld [vmem:[%s15] sm:$0x1]
      %v2182 = vlaneseq
      %v2183 = vshrl.u32 %v2182, 7
      %v2184 = vsub.s32 0, %v2183
      %v2185 = vrot.slane %v2180, %v2184
      %vm2187 = vcmask 523264
      %v2189 = vsel %vm2187, %v2171, 0
      %2191 = vmatprep.subr.mxu0 0.0
      %2192 = vmatpush1.msra.mxu0 0.0
      %2193 = vmatprep.subr.mxu0 0.0
      %2194 = vmatpush1.msra.mxu0 0.0
      %2195 = vmatprep.subr.mxu0 0.0
      %2196 = vmatpush1.msra.mxu0 0.0
      %2197 = vmatprep.subr.mxu0 0.0
      %2198 = vmatpush1.msra.mxu0 0.0
      %2199 = vmatprep.subr.mxu0 0.0
      %2200 = vmatpush1.msra.mxu0 0.0
      %2201 = vmatprep.subr.mxu0 0.0
      %2202 = vmatpush1.msra.mxu0 0.0
      %2203 = vmatprep.subr.mxu0 0.0
      %2204 = vmatpush1.msra.mxu0 0.0
      %2205 = vmatprep.subr.mxu0 0.0
      %2206 = vmatpush1.msra.mxu0 0.0
      %2207 = vmatprep.subr.mxu0 0.0
      %2208 = vmatpush1.msra.mxu0 %v2179
      %2209 = vmatprep.subr.mxu0 0.0
      %2210 = vmatpush1.msra.mxu0 %v2178
      %2211 = vmatprep.subr.mxu0 0.0
      %2212 = vmatpush1.msra.mxu0 %v2177
      %2213 = vmatprep.subr.mxu0 0.0
      %2214 = vmatpush1.msra.mxu0 %v2176
      %2215 = vmatprep.subr.mxu0 0.0
      %2216 = vmatpush1.msra.mxu0 %v2175
      %2217 = vmatprep.subr.mxu0 0.0
      %2218 = vmatpush1.msra.mxu0 %v2174
      %2219 = vmatprep.subr.mxu0 0.0
      %2220 = vmatpush1.msra.mxu0 %v2173
      %2221 = vmatprep.subr.mxu0 0.0
      %2222 = vmatpush1.msra.mxu0 %v2172
      %2223 = vmatprep.subr.mxu0 0.0
      %2224 = vmatpush2.msra.mxu0 0.0
      %2225 = vmatprep.subr.mxu0 0.0
      %2226 = vmatpush2.msra.mxu0 0.0
      %2227 = vmatprep.subr.mxu0 0.0
      %2228 = vmatpush2.msra.mxu0 0.0
      %2229 = vmatprep.subr.mxu0 0.0
      %2230 = vmatpush2.msra.mxu0 0.0
      %2231 = vmatprep.subr.mxu0 0.0
      %2232 = vmatpush2.msra.mxu0 0.0
      %2233 = vmatprep.subr.mxu0 0.0
      %2234 = vmatpush2.msra.mxu0 0.0
      %2235 = vmatprep.subr.mxu0 0.0
      %2236 = vmatpush2.msra.mxu0 0.0
      %2237 = vmatprep.subr.mxu0 0.0
      %2238 = vmatpush2.msra.mxu0 0.0
      %2239 = vmatprep.subr.mxu0 0.0
      %2240 = vmatpush2.msra.mxu0 0.0
      %2241 = vmatprep.subr.mxu0 0.0
      %2242 = vmatpush2.msra.mxu0 0.0
      %2243 = vmatprep.subr.mxu0 0.0
      %2244 = vmatpush2.msra.mxu0 0.0
      %2245 = vmatprep.subr.mxu0 0.0
      %2246 = vmatpush2.msra.mxu0 0.0
      %2247 = vmatprep.subr.mxu0 0.0
      %2248 = vmatpush2.msra.mxu0 0.0
      %2249 = vmatprep.subr.mxu0 0.0
      %2250 = vmatpush2.msra.mxu0 0.0
      %2251 = vmatprep.subr.mxu0 0.0
      %2252 = vmatpush2.msra.mxu0 0.0
      %2253 = vmatprep.subr.mxu0 0.0
      %2254 = vmatpush2.msra.mxu0 0.0
      %2255 = vmatprep.mubr.f32.mxu0 0.0
      %2256 = vmatmul.mubr.f32.gmra.mxu0 %v2189
      %v2257 = vpop.f32.mrf.mxu0
      %v2258 = vadd.f32 %v2185, %v2257
      %v2259 = vpop.f32.mrf.mxu0
      %2260 = vdwg.mxu0
      %v2261 = vmax.f32 %v2258, 0.0
      %v2262 = vld [vmem:[%s16] sm:$0xff]
      %v2263 = vld [vmem:[%s16 + $0x8] sm:$0xff]
      %v2264 = vld [vmem:[%s16 + $0x10] sm:$0xff]
      %v2265 = vld [vmem:[%s16 + $0x18] sm:$0xff]
      %v2266 = vld [vmem:[%s17] sm:$0x1]
      %v2268 = vlaneseq
      %v2269 = vshrl.u32 %v2268, 7
      %v2270 = vsub.s32 0, %v2269
      %v2271 = vrot.slane %v2266, %v2270
      %v2274 = vsel %vm1207, %v2261, 0
      %2276 = vmatprep.subr.mxu0 0.0
      %2277 = vmatpush1.msra.mxu0 0.0
      %2278 = vmatprep.subr.mxu0 0.0
      %2279 = vmatpush1.msra.mxu0 0.0
      %2280 = vmatprep.subr.mxu0 0.0
      %2281 = vmatpush1.msra.mxu0 0.0
      %2282 = vmatprep.subr.mxu0 0.0
      %2283 = vmatpush1.msra.mxu0 0.0
      %2284 = vmatprep.subr.mxu0 0.0
      %2285 = vmatpush1.msra.mxu0 0.0
      %2286 = vmatprep.subr.mxu0 0.0
      %2287 = vmatpush1.msra.mxu0 0.0
      %2288 = vmatprep.subr.mxu0 0.0
      %2289 = vmatpush1.msra.mxu0 0.0
      %2290 = vmatprep.subr.mxu0 0.0
      %2291 = vmatpush1.msra.mxu0 0.0
      %2292 = vmatprep.subr.mxu0 0.0
      %2293 = vmatpush1.msra.mxu0 0.0
      %2294 = vmatprep.subr.mxu0 0.0
      %2295 = vmatpush1.msra.mxu0 0.0
      %2296 = vmatprep.subr.mxu0 0.0
      %2297 = vmatpush1.msra.mxu0 0.0
      %2298 = vmatprep.subr.mxu0 0.0
      %2299 = vmatpush1.msra.mxu0 0.0
      %2300 = vmatprep.subr.mxu0 0.0
      %2301 = vmatpush1.msra.mxu0 %v2265
      %2302 = vmatprep.subr.mxu0 0.0
      %2303 = vmatpush1.msra.mxu0 %v2264
      %2304 = vmatprep.subr.mxu0 0.0
      %2305 = vmatpush1.msra.mxu0 %v2263
      %2306 = vmatprep.subr.mxu0 0.0
      %2307 = vmatpush1.msra.mxu0 %v2262
      %2308 = vmatprep.subr.mxu0 0.0
      %2309 = vmatpush2.msra.mxu0 0.0
      %2310 = vmatprep.subr.mxu0 0.0
      %2311 = vmatpush2.msra.mxu0 0.0
      %2312 = vmatprep.subr.mxu0 0.0
      %2313 = vmatpush2.msra.mxu0 0.0
      %2314 = vmatprep.subr.mxu0 0.0
      %2315 = vmatpush2.msra.mxu0 0.0
      %2316 = vmatprep.subr.mxu0 0.0
      %2317 = vmatpush2.msra.mxu0 0.0
      %2318 = vmatprep.subr.mxu0 0.0
      %2319 = vmatpush2.msra.mxu0 0.0
      %2320 = vmatprep.subr.mxu0 0.0
      %2321 = vmatpush2.msra.mxu0 0.0
      %2322 = vmatprep.subr.mxu0 0.0
      %2323 = vmatpush2.msra.mxu0 0.0
      %2324 = vmatprep.subr.mxu0 0.0
      %2325 = vmatpush2.msra.mxu0 0.0
      %2326 = vmatprep.subr.mxu0 0.0
      %2327 = vmatpush2.msra.mxu0 0.0
      %2328 = vmatprep.subr.mxu0 0.0
      %2329 = vmatpush2.msra.mxu0 0.0
      %2330 = vmatprep.subr.mxu0 0.0
      %2331 = vmatpush2.msra.mxu0 0.0
      %2332 = vmatprep.subr.mxu0 0.0
      %2333 = vmatpush2.msra.mxu0 0.0
      %2334 = vmatprep.subr.mxu0 0.0
      %2335 = vmatpush2.msra.mxu0 0.0
      %2336 = vmatprep.subr.mxu0 0.0
      %2337 = vmatpush2.msra.mxu0 0.0
      %2338 = vmatprep.subr.mxu0 0.0
      %2339 = vmatpush2.msra.mxu0 0.0
      %2340 = vmatprep.mubr.f32.mxu0 0.0
      %2341 = vmatmul.mubr.f32.gmra.mxu0 %v2274
      %v2342 = vpop.f32.mrf.mxu0
      %v2343 = vadd.f32 %v2271, %v2342
      %v2344 = vpop.f32.mrf.mxu0
      %2345 = vdwg.mxu0
      %v2346 = vmax.f32 %v2343, 0.0
      %v2348 = vlaneseq
      %v2349 = vshrl.u32 %v2348, 7
      %v2350 = vsub.s32 0, %v2349
      %v2351 = vrot.slane %v694, %v2350
      %v2354 = vsel %vm711, %v2346, 0
      %2356 = vmatprep.subr.mxu0 0.0
      %2357 = vmatpush1.msra.mxu0 0.0
      %2358 = vmatprep.subr.mxu0 0.0
      %2359 = vmatpush1.msra.mxu0 0.0
      %2360 = vmatprep.subr.mxu0 0.0
      %2361 = vmatpush1.msra.mxu0 0.0
      %2362 = vmatprep.subr.mxu0 0.0
      %2363 = vmatpush1.msra.mxu0 0.0
      %2364 = vmatprep.subr.mxu0 0.0
      %2365 = vmatpush1.msra.mxu0 0.0
      %2366 = vmatprep.subr.mxu0 0.0
      %2367 = vmatpush1.msra.mxu0 0.0
      %2368 = vmatprep.subr.mxu0 0.0
      %2369 = vmatpush1.msra.mxu0 0.0
      %2370 = vmatprep.subr.mxu0 0.0
      %2371 = vmatpush1.msra.mxu0 0.0
      %2372 = vmatprep.subr.mxu0 0.0
      %2373 = vmatpush1.msra.mxu0 0.0
      %2374 = vmatprep.subr.mxu0 0.0
      %2375 = vmatpush1.msra.mxu0 0.0
      %2376 = vmatprep.subr.mxu0 0.0
      %2377 = vmatpush1.msra.mxu0 0.0
      %2378 = vmatprep.subr.mxu0 0.0
      %2379 = vmatpush1.msra.mxu0 0.0
      %2380 = vmatprep.subr.mxu0 0.0
      %2381 = vmatpush1.msra.mxu0 0.0
      %2382 = vmatprep.subr.mxu0 0.0
      %2383 = vmatpush1.msra.mxu0 0.0
      %2384 = vmatprep.subr.mxu0 0.0
      %2385 = vmatpush1.msra.mxu0 %v693
      %2386 = vmatprep.subr.mxu0 0.0
      %2387 = vmatpush1.msra.mxu0 %v692
      %2388 = vmatprep.subr.mxu0 0.0
      %2389 = vmatpush2.msra.mxu0 0.0
      %2390 = vmatprep.subr.mxu0 0.0
      %2391 = vmatpush2.msra.mxu0 0.0
      %2392 = vmatprep.subr.mxu0 0.0
      %2393 = vmatpush2.msra.mxu0 0.0
      %2394 = vmatprep.subr.mxu0 0.0
      %2395 = vmatpush2.msra.mxu0 0.0
      %2396 = vmatprep.subr.mxu0 0.0
      %2397 = vmatpush2.msra.mxu0 0.0
      %2398 = vmatprep.subr.mxu0 0.0
      %2399 = vmatpush2.msra.mxu0 0.0
      %2400 = vmatprep.subr.mxu0 0.0
      %2401 = vmatpush2.msra.mxu0 0.0
      %2402 = vmatprep.subr.mxu0 0.0
      %2403 = vmatpush2.msra.mxu0 0.0
      %2404 = vmatprep.subr.mxu0 0.0
      %2405 = vmatpush2.msra.mxu0 0.0
      %2406 = vmatprep.subr.mxu0 0.0
      %2407 = vmatpush2.msra.mxu0 0.0
      %2408 = vmatprep.subr.mxu0 0.0
      %2409 = vmatpush2.msra.mxu0 0.0
      %2410 = vmatprep.subr.mxu0 0.0
      %2411 = vmatpush2.msra.mxu0 0.0
      %2412 = vmatprep.subr.mxu0 0.0
      %2413 = vmatpush2.msra.mxu0 0.0
      %2414 = vmatprep.subr.mxu0 0.0
      %2415 = vmatpush2.msra.mxu0 0.0
      %2416 = vmatprep.subr.mxu0 0.0
      %2417 = vmatpush2.msra.mxu0 0.0
      %2418 = vmatprep.subr.mxu0 0.0
      %2419 = vmatpush2.msra.mxu0 0.0
      %2420 = vmatprep.mubr.f32.mxu0 0.0
      %2421 = vmatmul.mubr.f32.gmra.mxu0 %v2354
      %v2422 = vpop.f32.mrf.mxu0
      %v2423 = vadd.f32 %v2351, %v2422
      %v2424 = vpop.f32.mrf.mxu0
      %2425 = vdwg.mxu0
      %v2426 = vxor.u32 %v2423, 2147483648
      %v2427 = vmul.f32 %v2426, 1.442695
      %v2428 = vpow.pop %v2427
      %v2429 = vadd.f32 %v2428, 1.0
      %v2430 = vrcp.pop %v2429
      %v2431 = vmul.f32 1.0, %v2430
      %2432 = vst.msk [vmem:[%s665] sm:$0xff] %vm1436, %v2431
      %p2433 = scmp.lt.s32.totalorder %s33, 1
      %s2434 = scalar_select %p2433, %s33, 1
      %s2435 = smul.addr %s2434, 8
      %s2436 = scalar_lea.vmem %s20, %s2435
      // Predicated region
      $region101: #{tpu_custom_call.1} parent=99 // pred_check
        %p2437 = pneg %p486
      $region102: #{tpu_custom_call.1} parent=99 // pred_check_branch
        %2439 = sbr.rel (%p2437) target = $region104
      $region103: #{tpu_custom_call.1} parent=99 // pred_region
        _
      $region104: #{tpu_custom_call.1} parent=99 // pred_fallthru
        _
    $region100: #{tpu_custom_call.1} parent=5 // pred_fallthru
      _
    %p2440 = scmp.le.s32.totalorder 2, %s28
    // Predicated region
    $region105: #{tpu_custom_call.1} parent=5 // pred_check
      %p2441 = pneg %p2440
    $region106: #{tpu_custom_call.1} parent=5 // pred_check_branch
      %2443 = sbr.rel (%p2441) target = $region108
    $region107: #{tpu_custom_call.1} parent=5 // pred_region
      %s2444 = ssub.s32 %s28, 2
      // Predicated region
      $region109: #{tpu_custom_call.1} parent=107 // pred_check
        %p2445 = pneg %p492
      $region110: #{tpu_custom_call.1} parent=107 // pred_check_branch
        %2447 = sbr.rel (%p2445) target = $region112
      $region111: #{tpu_custom_call.1} parent=107 // pred_region
        %p2448 = scmp.lt.s32.totalorder %s34, 1
        %s2449 = scalar_select %p2448, %s34, 1
        %s2450 = smul.addr %s2449, 8
        %s2451 = scalar_lea.vmem %s20, %s2450
      $region112: #{tpu_custom_call.1} parent=107 // pred_fallthru
        _
    $region108: #{tpu_custom_call.1} parent=5 // pred_fallthru
      _
  $region6: #{tpu_custom_call.1} parent=0 // loop_footer
    %s32 = sadd.s32 1, %s28
  $region7: #{tpu_custom_call.1} parent=0 // loop_footer_branch
    %27 = sbr.rel target = $region3
  $region8: #{tpu_custom_call.1} parent=0 // loop_exit
    _

</llo_original>
